<compile_context>
chip_gen: v7x
topology: tpu7x:2x2x1
jax: 0.10.0
libtpu: 0.0.40
codegen_flags: <defaults>
</compile_context>

<pallas_src>
import functools

import jax
import jax.numpy as jnp
from jax.experimental import pallas as pl
from jax.experimental.pallas import tpu as pltpu


def _mpnn_kernel(x_ref, e_ref,
                 w1c_ref, w2c_ref, wec_ref, bias_n_ref,
                 wo1_ref, wagg_ref, bias_out_ref,
                 o_ref,
                 node1_s, node2_s, acc_s,
                 *, tn):
    f32 = jnp.float32
    k = pl.program_id(1)
    n_nodes = x_ref.shape[1]
    hidden = o_ref.shape[2]

    # --- per-batch node terms, computed once per batch (first sender tile) ---
    @pl.when(k == 0)
    def _init():
        x = x_ref[0]                                               # (N, 2H) f32
        node1_s[...] = jnp.dot(x, w1c_ref[...],
                               preferred_element_type=f32)         # (N, H)
        node2_s[...] = (jnp.dot(x, w2c_ref[...],
                                preferred_element_type=f32)
                        + bias_n_ref[...])                         # (N, H)
        acc_s[...] = jnp.zeros_like(acc_s)

    # --- fused per-edge work for this sender tile ----------------------------
    # edge tile: (tn senders, N receivers, H) f32 from HBM; leading-dim
    # collapse (no lane relayout), in-VMEM bf16 cast, single MXU matmul with
    # f32 accumulation.
    e_slab = e_ref[0].reshape(tn * n_nodes, hidden)                # (tn*N, H) f32
    edge_term = jnp.dot(e_slab.astype(jnp.bfloat16), wec_ref[...],
                        preferred_element_type=f32)                # (tn*N, H) f32
    edge_term = edge_term.reshape(tn, n_nodes, hidden)

    start = pl.multiple_of(k * tn, tn)
    n1_tile = node1_s[pl.ds(start, tn), :]                         # (tn, H)
    pre = edge_term + n1_tile[:, None, :] + node2_s[...][None, :, :]
    h = jnp.maximum(pre, 0.0)                                      # ReLU
    acc_s[...] += jnp.sum(h, axis=0)                               # sum over senders

    # --- readout (Wn2 and Wo2 deferred past the linear aggregation) ----------
    @pl.when(k == pl.num_programs(1) - 1)
    def _finalize():
        x = x_ref[0]
        out = (jnp.dot(x, wo1_ref[...], preferred_element_type=f32)
               + jnp.dot(acc_s[...], wagg_ref[...], preferred_element_type=f32)
               + bias_out_ref[...])
        o_ref[0] = out.astype(o_ref.dtype)


def _pick_sender_tile(n_nodes, hidden, budget_bytes=8 * 1024 * 1024):
    # Double-buffered f32 edge tile (8 B/elem) + bf16 cast copy and f32 temps
    # of the same logical size (~12 B/elem) per resident tile.
    per_sender_row = n_nodes * hidden * (8 + 12)
    cap = max(8, (budget_bytes // max(per_sender_row, 1)) // 8 * 8)
    if n_nodes <= cap:
        return n_nodes
    tn = min(cap, n_nodes)
    while tn >= 8:
        if n_nodes % tn == 0:
            return tn
        tn -= 8
    return n_nodes  # no aligned divisor: fall back to full sender axis


def mpnn_forward(x, adj, edge_attr, params, *, sender_tile=None):
    del adj  # forward() replaces adj with ones_like(adj); aggregator = "sum"
    B, N, in_ch = x.shape
    H = edge_attr.shape[-1]
    (w1, b1, w2, b2, we, be, wn1, bn1, wn2, bn2, wo1, bo1, wo2, bo2) = params

    # ---- algebraic fusion of the linear prefix / suffix (done once, f32) ----
    w1c = w1 @ wn1                                     # (2H, H)
    w2c = w2 @ wn1                                     # (2H, H)
    wec = (we @ wn1).astype(jnp.bfloat16)              # (H, H)  bf16 MXU weight
    bias_n = (b1 + b2 + be) @ wn1 + bn1                # (1, H)
    wagg = wn2 @ wo2                                   # (H, H)
    bias_out = bo1 + bo2 + float(N) * (bn2 @ wo2)      # (1, H)

    if sender_tile is None:
        sender_tile = _pick_sender_tile(N, H)
    assert N % sender_tile == 0, "sender_tile must divide N"
    num_k = N // sender_tile

    def _w_spec(arr):  # 2-D replicated weight, same block for every grid step
        return pl.BlockSpec(arr.shape, lambda b, k: (0, 0))

    in_specs = [
        pl.BlockSpec((1, N, in_ch), lambda b, k: (b, 0, 0)),                 # x
        pl.BlockSpec((1, sender_tile, N, H), lambda b, k: (b, k, 0, 0)),     # edge
        _w_spec(w1c), _w_spec(w2c), _w_spec(wec), _w_spec(bias_n),
        _w_spec(wo1), _w_spec(wagg), _w_spec(bias_out),
    ]

    cost = pl.CostEstimate(
        flops=int(2 * B * N * N * H * H                 # fused edge matmul
                  + B * (3 * 2 * N * (2 * H) * H        # node1/node2/readout
                         + 2 * N * H * H)),             # deferred Wn2@Wo2 apply
        transcendentals=0,
        bytes_accessed=int(edge_attr.size * 4 + x.size * 4 + B * N * H * 4
                           + (w1c.size + w2c.size + wo1.size + wagg.size) * 4),
    )

    return pl.pallas_call(
        functools.partial(_mpnn_kernel, tn=sender_tile),
        out_shape=jax.ShapeDtypeStruct((B, N, H), jnp.float32),
        grid_spec=pltpu.PrefetchScalarGridSpec(
            num_scalar_prefetch=0,
            grid=(B, num_k),
            in_specs=in_specs,
            out_specs=pl.BlockSpec((1, N, H), lambda b, k: (b, 0, 0)),
            scratch_shapes=[
                pltpu.VMEM((N, H), jnp.float32),   # node1 (sender term)
                pltpu.VMEM((N, H), jnp.float32),   # node2 (receiver term + bias)
                pltpu.VMEM((N, H), jnp.float32),   # agg_h accumulator
            ],
        ),
        compiler_params=pltpu.CompilerParams(
            dimension_semantics=("parallel", "arbitrary"),
            vmem_limit_bytes=64 * 1024 * 1024,
        ),
        cost_estimate=cost,
    )(x, edge_attr, w1c, w2c, wec, bias_n, wo1, wagg, bias_out)


def mpnn_reference(x, edge_attr, params):
    (w1, b1, w2, b2, we, be, wn1, bn1, wn2, bn2, wo1, bo1, wo2, bo2) = params
    msg1 = x @ w1 + b1                                   # (B, N, H)
    msg2 = x @ w2 + b2                                   # (B, N, H)
    msg_e = edge_attr @ we + be                          # (B, N, N, H)
    msgs = msg1[:, :, None, :] + msg2[:, None, :, :] + msg_e
    h = jax.nn.relu(msgs @ wn1 + bn1)
    msgs = h @ wn2 + bn2
    agg = jnp.sum(msgs, axis=1)                          # sum over sender axis
    return x @ wo1 + bo1 + agg @ wo2 + bo2


def init_linear(key, fan_in, fan_out):
    # PyTorch Linear default init: U(-1/sqrt(fan_in), 1/sqrt(fan_in));
    # weights stored here directly in (in, out) layout (i.e. W.T of torch).
    kw, kb = jax.random.split(key)
    bound = 1.0 / jnp.sqrt(fan_in)
    w = jax.random.uniform(kw, (fan_in, fan_out), jnp.float32, -bound, bound)
    b = jax.random.uniform(kb, (1, fan_out), jnp.float32, -bound, bound)
    return w, b


if __name__ == "__main__":
    B, N, H = 2, 16, 32  # batch, nodes, num_hidden
    key = jax.random.PRNGKey(0)
    keys = jax.random.split(key, 10)

    x = jax.random.normal(keys[0], (B, N, 2 * H), jnp.float32)
    adj = jnp.zeros((B, N, N), jnp.float32)  # content irrelevant: replaced by ones
    edge_attr = jax.random.normal(keys[1], (B, N, N, H), jnp.float32)

    w1, b1 = init_linear(keys[2], 2 * H, H)    # m_1
    w2, b2 = init_linear(keys[3], 2 * H, H)    # m_2
    we, be = init_linear(keys[4], H, H)        # m_e (edge)
    wn1, bn1 = init_linear(keys[5], H, H)      # net[0]
    wn2, bn2 = init_linear(keys[6], H, H)      # net[2]
    wo1, bo1 = init_linear(keys[7], 2 * H, H)  # o_1
    wo2, bo2 = init_linear(keys[8], H, H)      # o_2
    params = (w1, b1, w2, b2, we, be, wn1, bn1, wn2, bn2, wo1, bo1, wo2, bo2)

    # sender_tile=8 -> grid (B, 2): exercises the tiled-reduction accumulator.
    out = mpnn_forward(x, adj, edge_attr, params, sender_tile=8)
    out = jax.block_until_ready(out)

    ref = mpnn_reference(x, edge_attr, params)
    assert out.shape == (B, N, H)
    # bf16 edge tile / fused edge weight on the MXU -> slightly looser tolerance.
    assert jnp.allclose(out, ref, atol=5e-2, rtol=5e-2), "mismatch vs reference"

    print("KERNEL_OK")
</pallas_src>

<mosaic_0001>
module attributes {stable_mosaic.version = 11 : i64} {
  func.func @_mpnn_kernel(%arg0: i32, %arg1: i32, %arg2: memref<1x16x64xf32, #tpu.memory_space<vmem>>, %arg3: memref<1x8x16x32xf32, #tpu.memory_space<vmem>>, %arg4: memref<64x32xf32, #tpu.memory_space<vmem>>, %arg5: memref<64x32xf32, #tpu.memory_space<vmem>>, %arg6: memref<32x32xbf16, #tpu.memory_space<vmem>>, %arg7: memref<1x32xf32, #tpu.memory_space<vmem>>, %arg8: memref<64x32xf32, #tpu.memory_space<vmem>>, %arg9: memref<32x32xf32, #tpu.memory_space<vmem>>, %arg10: memref<1x32xf32, #tpu.memory_space<vmem>>, %arg11: memref<1x16x32xf32, #tpu.memory_space<vmem>>, %arg12: memref<16x32xf32, #tpu.memory_space<vmem>>, %arg13: memref<16x32xf32, #tpu.memory_space<vmem>>, %arg14: memref<16x32xf32, #tpu.memory_space<vmem>>) attributes {dimension_semantics = [#tpu.dimension_semantics<parallel>, #tpu.dimension_semantics<arbitrary>], iteration_bounds = array<i64: 2, 2>, scalar_prefetch = 0 : i64, scratch_operands = 3 : i64, tpu.core_type = #tpu.core_type<tc>, window_params = [{transform_indices = @transform_0, window_bounds = array<i64: 1, 16, 64>}, {transform_indices = @transform_1, window_bounds = array<i64: 1, 8, 16, 32>}, {pipeline_mode = #tpu.pipeline_mode<synchronous>, transform_indices = @transform_2, window_bounds = array<i64: 64, 32>}, {pipeline_mode = #tpu.pipeline_mode<synchronous>, transform_indices = @transform_3, window_bounds = array<i64: 64, 32>}, {pipeline_mode = #tpu.pipeline_mode<synchronous>, transform_indices = @transform_4, window_bounds = array<i64: 32, 32>}, {pipeline_mode = #tpu.pipeline_mode<synchronous>, transform_indices = @transform_5, window_bounds = array<i64: 1, 32>}, {pipeline_mode = #tpu.pipeline_mode<synchronous>, transform_indices = @transform_6, window_bounds = array<i64: 64, 32>}, {pipeline_mode = #tpu.pipeline_mode<synchronous>, transform_indices = @transform_7, window_bounds = array<i64: 32, 32>}, {pipeline_mode = #tpu.pipeline_mode<synchronous>, transform_indices = @transform_8, window_bounds = array<i64: 1, 32>}, {transform_indices = @transform_9, window_bounds = array<i64: 1, 16, 32>}]} {
    %c0_i32 = arith.constant 0 : i32
    %0 = arith.cmpi eq, %arg1, %c0_i32 : i32
    %1 = arith.extui %0 : i1 to i32
    %c0_i32_0 = arith.constant 0 : i32
    %2 = arith.cmpi ne, %1, %c0_i32_0 : i32
    scf.if %2 {
      %c0_16 = arith.constant 0 : index
      %c0_17 = arith.constant 0 : index
      %c0_18 = arith.constant 0 : index
      %30 = vector.load %arg2[%c0_16, %c0_17, %c0_18] : memref<1x16x64xf32, #tpu.memory_space<vmem>>, vector<1x16x64xf32>
      %31 = vector.shape_cast %30 : vector<1x16x64xf32> to vector<16x64xf32>
      %c0_19 = arith.constant 0 : index
      %c0_20 = arith.constant 0 : index
      %32 = vector.load %arg4[%c0_19, %c0_20] : memref<64x32xf32, #tpu.memory_space<vmem>>, vector<64x32xf32>
      %cst_21 = arith.constant dense<0.000000e+00> : vector<16x32xf32>
      %33 = tpu.matmul %31, %32, %cst_21 {dimension_numbers = #tpu.dot_dimension_numbers<[1], [0], [0], [1], [0, 0, 1, 1], [], []>} : vector<16x64xf32>, vector<64x32xf32>, vector<16x32xf32> -> vector<16x32xf32>
      %c0_22 = arith.constant 0 : index
      %c0_23 = arith.constant 0 : index
      %34 = vector.load %arg12[%c0_22, %c0_23] : memref<16x32xf32, #tpu.memory_space<vmem>>, vector<16x32xf32>
      tpu.vector_store %arg12[%c0_22, %c0_23], %33 {strides = array<i32>} : memref<16x32xf32, #tpu.memory_space<vmem>>, vector<16x32xf32>,
      %c0_24 = arith.constant 0 : index
      %c0_25 = arith.constant 0 : index
      %35 = vector.load %arg5[%c0_24, %c0_25] : memref<64x32xf32, #tpu.memory_space<vmem>>, vector<64x32xf32>
      %cst_26 = arith.constant dense<0.000000e+00> : vector<16x32xf32>
      %36 = tpu.matmul %31, %35, %cst_26 {dimension_numbers = #tpu.dot_dimension_numbers<[1], [0], [0], [1], [0, 0, 1, 1], [], []>} : vector<16x64xf32>, vector<64x32xf32>, vector<16x32xf32> -> vector<16x32xf32>
      %c0_27 = arith.constant 0 : index
      %c0_28 = arith.constant 0 : index
      %37 = vector.load %arg7[%c0_27, %c0_28] : memref<1x32xf32, #tpu.memory_space<vmem>>, vector<1x32xf32>
      %38 = vector.broadcast %37 : vector<1x32xf32> to vector<16x32xf32>
      %39 = arith.addf %36, %38 : vector<16x32xf32>
      %c0_29 = arith.constant 0 : index
      %c0_30 = arith.constant 0 : index
      %40 = vector.load %arg13[%c0_29, %c0_30] : memref<16x32xf32, #tpu.memory_space<vmem>>, vector<16x32xf32>
      tpu.vector_store %arg13[%c0_29, %c0_30], %39 {strides = array<i32>} : memref<16x32xf32, #tpu.memory_space<vmem>>, vector<16x32xf32>,
      %cst_31 = arith.constant 0.000000e+00 : f32
      %41 = vector.broadcast %cst_31 : f32 to vector<16x32xf32>
      %c0_32 = arith.constant 0 : index
      %c0_33 = arith.constant 0 : index
      %42 = vector.load %arg14[%c0_32, %c0_33] : memref<16x32xf32, #tpu.memory_space<vmem>>, vector<16x32xf32>
      tpu.vector_store %arg14[%c0_32, %c0_33], %41 {strides = array<i32>} : memref<16x32xf32, #tpu.memory_space<vmem>>, vector<16x32xf32>,
    } else {
    }
    %c0 = arith.constant 0 : index
    %c0_1 = arith.constant 0 : index
    %c0_2 = arith.constant 0 : index
    %c0_3 = arith.constant 0 : index
    %3 = vector.load %arg3[%c0, %c0_1, %c0_2, %c0_3] : memref<1x8x16x32xf32, #tpu.memory_space<vmem>>, vector<1x8x16x32xf32>
    %4 = vector.shape_cast %3 : vector<1x8x16x32xf32> to vector<8x16x32xf32>
    %5 = vector.shape_cast %4 : vector<8x16x32xf32> to vector<128x32xf32>
    %6 = arith.truncf %5 : vector<128x32xf32> to vector<128x32xbf16>
    %c0_4 = arith.constant 0 : index
    %c0_5 = arith.constant 0 : index
    %7 = vector.load %arg6[%c0_4, %c0_5] : memref<32x32xbf16, #tpu.memory_space<vmem>>, vector<32x32xbf16>
    %cst = arith.constant dense<0.000000e+00> : vector<128x32xf32>
    %8 = tpu.matmul %6, %7, %cst {dimension_numbers = #tpu.dot_dimension_numbers<[1], [0], [0], [1], [0, 0, 1, 1], [], []>} : vector<128x32xbf16>, vector<32x32xbf16>, vector<128x32xf32> -> vector<128x32xf32>
    %9 = vector.shape_cast %8 : vector<128x32xf32> to vector<8x16x32xf32>
    %c8_i32 = arith.constant 8 : i32
    %10 = arith.muli %arg1, %c8_i32 : i32
    %11 = tpu.assume_multiple %10, 8 : i32
    %12 = arith.index_cast %11 : i32 to index
    %c0_6 = arith.constant 0 : index
    %13 = vector.load %arg12[%12, %c0_6] : memref<16x32xf32, #tpu.memory_space<vmem>>, vector<8x32xf32>
    %14 = vector.shape_cast %13 : vector<8x32xf32> to vector<8x1x32xf32>
    %15 = vector.broadcast %14 : vector<8x1x32xf32> to vector<8x16x32xf32>
    %16 = arith.addf %9, %15 : vector<8x16x32xf32>
    %c0_7 = arith.constant 0 : index
    %c0_8 = arith.constant 0 : index
    %17 = vector.load %arg13[%c0_7, %c0_8] : memref<16x32xf32, #tpu.memory_space<vmem>>, vector<16x32xf32>
    %18 = vector.shape_cast %17 : vector<16x32xf32> to vector<1x16x32xf32>
    %19 = vector.broadcast %18 : vector<1x16x32xf32> to vector<8x16x32xf32>
    %20 = arith.addf %16, %19 : vector<8x16x32xf32>
    %cst_9 = arith.constant 0.000000e+00 : f32
    %21 = vector.broadcast %cst_9 : f32 to vector<8x16x32xf32>
    %22 = arith.maximumf %20, %21 : vector<8x16x32xf32>
    %c0_10 = arith.constant 0 : index
    %c0_11 = arith.constant 0 : index
    %23 = vector.load %arg14[%c0_10, %c0_11] : memref<16x32xf32, #tpu.memory_space<vmem>>, vector<16x32xf32>
    %cst_12 = arith.constant dense<0.000000e+00> : vector<16x32xf32>
    %24 = vector.multi_reduction <add>, %22, %cst_12 [0] : vector<8x16x32xf32> to vector<16x32xf32>
    %25 = arith.addf %23, %24 : vector<16x32xf32>
    %c0_13 = arith.constant 0 : index
    %c0_14 = arith.constant 0 : index
    %26 = vector.load %arg14[%c0_13, %c0_14] : memref<16x32xf32, #tpu.memory_space<vmem>>, vector<16x32xf32>
    tpu.vector_store %arg14[%c0_13, %c0_14], %25 {strides = array<i32>} : memref<16x32xf32, #tpu.memory_space<vmem>>, vector<16x32xf32>,
    %c1_i32 = arith.constant 1 : i32
    %27 = arith.cmpi eq, %arg1, %c1_i32 : i32
    %28 = arith.extui %27 : i1 to i32
    %c0_i32_15 = arith.constant 0 : i32
    %29 = arith.cmpi ne, %28, %c0_i32_15 : i32
    scf.if %29 {
      %c0_16 = arith.constant 0 : index
      %c0_17 = arith.constant 0 : index
      %c0_18 = arith.constant 0 : index
      %30 = vector.load %arg2[%c0_16, %c0_17, %c0_18] : memref<1x16x64xf32, #tpu.memory_space<vmem>>, vector<1x16x64xf32>
      %31 = vector.shape_cast %30 : vector<1x16x64xf32> to vector<16x64xf32>
      %c0_19 = arith.constant 0 : index
      %c0_20 = arith.constant 0 : index
      %32 = vector.load %arg8[%c0_19, %c0_20] : memref<64x32xf32, #tpu.memory_space<vmem>>, vector<64x32xf32>
      %cst_21 = arith.constant dense<0.000000e+00> : vector<16x32xf32>
      %33 = tpu.matmul %31, %32, %cst_21 {dimension_numbers = #tpu.dot_dimension_numbers<[1], [0], [0], [1], [0, 0, 1, 1], [], []>} : vector<16x64xf32>, vector<64x32xf32>, vector<16x32xf32> -> vector<16x32xf32>
      %c0_22 = arith.constant 0 : index
      %c0_23 = arith.constant 0 : index
      %34 = vector.load %arg14[%c0_22, %c0_23] : memref<16x32xf32, #tpu.memory_space<vmem>>, vector<16x32xf32>
      %c0_24 = arith.constant 0 : index
      %c0_25 = arith.constant 0 : index
      %35 = vector.load %arg9[%c0_24, %c0_25] : memref<32x32xf32, #tpu.memory_space<vmem>>, vector<32x32xf32>
      %cst_26 = arith.constant dense<0.000000e+00> : vector<16x32xf32>
      %36 = tpu.matmul %34, %35, %cst_26 {dimension_numbers = #tpu.dot_dimension_numbers<[1], [0], [0], [1], [0, 0, 1, 1], [], []>} : vector<16x32xf32>, vector<32x32xf32>, vector<16x32xf32> -> vector<16x32xf32>
      %37 = arith.addf %33, %36 : vector<16x32xf32>
      %c0_27 = arith.constant 0 : index
      %c0_28 = arith.constant 0 : index
      %38 = vector.load %arg10[%c0_27, %c0_28] : memref<1x32xf32, #tpu.memory_space<vmem>>, vector<1x32xf32>
      %39 = vector.broadcast %38 : vector<1x32xf32> to vector<16x32xf32>
      %40 = arith.addf %37, %39 : vector<16x32xf32>
      %c0_29 = arith.constant 0 : index
      %c0_30 = arith.constant 0 : index
      %c0_31 = arith.constant 0 : index
      %41 = vector.load %arg11[%c0_29, %c0_30, %c0_31] : memref<1x16x32xf32, #tpu.memory_space<vmem>>, vector<1x16x32xf32>
      %42 = vector.shape_cast %41 : vector<1x16x32xf32> to vector<16x32xf32>
      %43 = vector.shape_cast %40 : vector<16x32xf32> to vector<1x16x32xf32>
      tpu.vector_store %arg11[%c0_29, %c0_30, %c0_31], %43 {strides = array<i32>} : memref<1x16x32xf32, #tpu.memory_space<vmem>>, vector<1x16x32xf32>,
    } else {
    }
    return
  }
  func.func @transform_0(%arg0: i32, %arg1: i32) -> (i32, i32, i32) {
    %c0_i32 = arith.constant 0 : i32
    %c0_i32_0 = arith.constant 0 : i32
    %c0_i32_1 = arith.constant 0 : i32
    return %arg0, %c0_i32, %c0_i32_0 : i32, i32, i32
  }
  func.func @transform_1(%arg0: i32, %arg1: i32) -> (i32, i32, i32, i32) {
    %c0_i32 = arith.constant 0 : i32
    %c0_i32_0 = arith.constant 0 : i32
    %c0_i32_1 = arith.constant 0 : i32
    return %arg0, %arg1, %c0_i32, %c0_i32_0 : i32, i32, i32, i32
  }
  func.func @transform_2(%arg0: i32, %arg1: i32) -> (i32, i32) {
    %c0_i32 = arith.constant 0 : i32
    %c0_i32_0 = arith.constant 0 : i32
    %c0_i32_1 = arith.constant 0 : i32
    return %c0_i32, %c0_i32_0 : i32, i32
  }
  func.func @transform_3(%arg0: i32, %arg1: i32) -> (i32, i32) {
    %c0_i32 = arith.constant 0 : i32
    %c0_i32_0 = arith.constant 0 : i32
    %c0_i32_1 = arith.constant 0 : i32
    return %c0_i32, %c0_i32_0 : i32, i32
  }
  func.func @transform_4(%arg0: i32, %arg1: i32) -> (i32, i32) {
    %c0_i32 = arith.constant 0 : i32
    %c0_i32_0 = arith.constant 0 : i32
    %c0_i32_1 = arith.constant 0 : i32
    return %c0_i32, %c0_i32_0 : i32, i32
  }
  func.func @transform_5(%arg0: i32, %arg1: i32) -> (i32, i32) {
    %c0_i32 = arith.constant 0 : i32
    %c0_i32_0 = arith.constant 0 : i32
    %c0_i32_1 = arith.constant 0 : i32
    return %c0_i32, %c0_i32_0 : i32, i32
  }
  func.func @transform_6(%arg0: i32, %arg1: i32) -> (i32, i32) {
    %c0_i32 = arith.constant 0 : i32
    %c0_i32_0 = arith.constant 0 : i32
    %c0_i32_1 = arith.constant 0 : i32
    return %c0_i32, %c0_i32_0 : i32, i32
  }
  func.func @transform_7(%arg0: i32, %arg1: i32) -> (i32, i32) {
    %c0_i32 = arith.constant 0 : i32
    %c0_i32_0 = arith.constant 0 : i32
    %c0_i32_1 = arith.constant 0 : i32
    return %c0_i32, %c0_i32_0 : i32, i32
  }
  func.func @transform_8(%arg0: i32, %arg1: i32) -> (i32, i32) {
    %c0_i32 = arith.constant 0 : i32
    %c0_i32_0 = arith.constant 0 : i32
    %c0_i32_1 = arith.constant 0 : i32
    return %c0_i32, %c0_i32_0 : i32, i32
  }
  func.func @transform_9(%arg0: i32, %arg1: i32) -> (i32, i32, i32) {
    %c0_i32 = arith.constant 0 : i32
    %c0_i32_0 = arith.constant 0 : i32
    %c0_i32_1 = arith.constant 0 : i32
    return %arg0, %c0_i32, %c0_i32_0 : i32, i32, i32
  }
}

</mosaic_0001>

<llo_original>
// kernel: tpu_custom_call.1
$region0: #{tpu_custom_call.1}
  #allocation0 [shape = 'u32[]', space=smem, size = 0x4, offset = 0x4, fixed_abs, tag = 'smem constant byte address 0x4 - core index']
  #allocation1 [shape = 'u32[144,128]{1,0:T(1,128)}', space=vmem, size = 0x12000, scoped, tag = 'internal scratch']
  #allocation2 [shape = 'f32[16,32]{1,0:T(8,128)}', space=vmem, size = 0x2000, scoped, tag = 'scratch operand']
  #allocation3 [shape = 'f32[16,32]{1,0:T(8,128)}', space=vmem, size = 0x2000, scoped, tag = 'scratch operand']
  #allocation4 [shape = 'f32[16,32]{1,0:T(8,128)}', space=vmem, size = 0x2000, scoped, tag = 'scratch operand']
  %s0 = inlined_call_operand.hbm [shape: f32[2,16,64], index: 0, kind: input, shape index: {}]
  %s1 = inlined_call_operand.hbm [shape: f32[2,16,16,32], index: 1, kind: input, shape index: {}]
  %s2 = inlined_call_operand.hbm [shape: f32[64,32], index: 2, kind: input, shape index: {}]
  %s3 = inlined_call_operand.hbm [shape: f32[64,32], index: 3, kind: input, shape index: {}]
  %s4 = inlined_call_operand.hbm [shape: bf16[32,32], index: 4, kind: input, shape index: {}]
  %s5 = inlined_call_operand.hbm [shape: f32[1,32], index: 5, kind: input, shape index: {}]
  %s6 = inlined_call_operand.hbm [shape: f32[64,32], index: 6, kind: input, shape index: {}]
  %s7 = inlined_call_operand.hbm [shape: f32[32,32], index: 7, kind: input, shape index: {}]
  %s8 = inlined_call_operand.hbm [shape: f32[1,32], index: 8, kind: input, shape index: {}]
  %s9 = inlined_call_operand.hbm [shape: f32[2,16,32], index: 9, kind: output, shape index: {}]
  %s10 = sld [smem:[#allocation0]]
  $region113: #{tpu_custom_call.1} parent=0
    _
  %s12 = ssub.s32 1, %s10
  %s13 = scalar_select 0, %s12, %s10
  $region1: #{tpu_custom_call.1} parent=0
    #allocation5 [shape = 'u8[16384]{0}', space=vmem, size = 0x4000, scoped, tag = 'input window, operand 0']
    #allocation6 [shape = 's32[2]{0}', space=sflag, size = 0x8, scoped, tag = 'scoped memory for tpu_custom_call.1']
    #allocation7 [shape = 's32[2]{0}', space=sflag, size = 0x8, scoped, tag = 'scoped memory for tpu_custom_call.1']
    #allocation8 [shape = 'u8[131072]{0}', space=vmem, size = 0x20000, scoped, tag = 'input window, operand 1']
    #allocation9 [shape = 's32[2]{0}', space=sflag, size = 0x8, scoped, tag = 'scoped memory for tpu_custom_call.1']
    #allocation10 [shape = 'u8[32768]{0}', space=vmem, size = 0x8000, scoped, tag = 'input window, operand 2, single buffered']
    #allocation11 [shape = 'u8[32768]{0}', space=vmem, size = 0x8000, scoped, tag = 'input window, operand 3, single buffered']
    #allocation12 [shape = 's32[1]{0}', space=sflag, size = 0x4, scoped, tag = 'scoped memory for tpu_custom_call.1']
    #allocation13 [shape = 'u8[8192]{0}', space=vmem, size = 0x2000, scoped, tag = 'input window, operand 4, single buffered']
    #allocation14 [shape = 'u8[512]{0}', space=vmem, size = 0x400, scoped, tag = 'input window, operand 5, single buffered']
    #allocation15 [shape = 's32[1]{0}', space=sflag, size = 0x4, scoped, tag = 'scoped memory for tpu_custom_call.1']
    #allocation16 [shape = 'u8[32768]{0}', space=vmem, size = 0x8000, scoped, tag = 'input window, operand 6, single buffered']
    #allocation17 [shape = 'u8[16384]{0}', space=vmem, size = 0x4000, scoped, tag = 'input window, operand 7, single buffered']
    #allocation18 [shape = 's32[1]{0}', space=sflag, size = 0x4, scoped, tag = 'scoped memory for tpu_custom_call.1']
    #allocation19 [shape = 'u8[512]{0}', space=vmem, size = 0x400, scoped, tag = 'input window, operand 8, single buffered']
    #allocation20 [shape = 'u8[16384]{0}', space=vmem, size = 0x4000, scoped, tag = 'output window, operand 0']
    %14 = vsyncpa [#allocation6], 0
    %s15 = scalar_lea.sflag [#allocation6], 1
    %16 = vsyncpa %s15, 0
    %17 = vsyncpa [#allocation9], 0
    %s18 = scalar_lea.sflag [#allocation9], 1
    %19 = vsyncpa %s18, 0
    %20 = vsyncpa [#allocation12], 0
    %21 = vsyncpa [#allocation15], 0
    %22 = vsyncpa [#allocation18], 0
    %23 = vsyncpa [#allocation7], 0
    %s24 = scalar_lea.sflag [#allocation7], 1
    %25 = vsyncpa %s24, 0
    loop: start=0, step=1, limit=6
    $region2: #{tpu_custom_call.1} parent=1 // loop_pre_header
      _
    $region3: #{tpu_custom_call.1} parent=1 // loop_header
      %s27 = sphi 0, %s31
      %p28 = scmp.ge.s32.totalorder %s27, 6
      %s34 = sphi 0, %s46
      %s35 = sphi 0, %s42
      %s36 = sphi 0, %s34
      %s37 = sphi 0, %s35
      %s38 = sphi 0, %s36
      %s39 = sphi 0, %s37
      %s49 = sphi 0, %s51
      %s52 = sphi 0, %s49
      %s53 = sphi 0, %s52
      %s69 = sphi 0, %s53
      %s77 = sphi 0, %s79
      %s80 = sphi 0, %s77
      %s81 = sphi 0, %s80
      %s97 = sphi 0, %s81
      %s101 = sphi 0, %s101
      %s103 = sphi 0, %s101
      %s104 = sphi 0, %s103
      %s118 = sphi 0, %s104
      %s122 = sphi 0, %s122
      %s124 = sphi 0, %s122
      %s125 = sphi 0, %s124
      %s139 = sphi 0, %s125
      %s143 = sphi 0, %s143
      %s145 = sphi 0, %s143
      %s146 = sphi 0, %s145
      %s160 = sphi 0, %s146
      %s164 = sphi 0, %s164
      %s166 = sphi 0, %s164
      %s167 = sphi 0, %s166
      %s181 = sphi 0, %s167
      %s185 = sphi 0, %s185
      %s187 = sphi 0, %s185
      %s188 = sphi 0, %s187
      %s202 = sphi 0, %s188
      %s206 = sphi 0, %s206
      %s208 = sphi 0, %s206
      %s209 = sphi 0, %s208
      %s223 = sphi 0, %s209
      %s227 = sphi 0, %s227
      %s229 = sphi 0, %s227
      %s230 = sphi 0, %s229
      %s244 = sphi 0, %s230
      %s250 = sphi 0, %s252
      %s253 = sphi 0, %s250
      %s254 = sphi 0, %s253
      %s270 = sphi 0, %s254
    $region4: #{tpu_custom_call.1} parent=1 // loop_header_branch
      %30 = sbr.rel (%p28) target = $region8
    $region5: #{tpu_custom_call.1} parent=1 // loop_body
      %s32 = ssub.s32 %s27, 1
      %s33 = ssub.s32 %s27, 2
      %s40 = sadd.s32 1, %s35
      %p41 = scmp.ge.s32.totalorder %s40, 2
      %s42 = scalar_select %p41, 0, %s40
      %s43 = sadd.s32 1, %s34
      %s44 = scalar_select %p41, %s43, %s34
      %p45 = scmp.ge.s32.totalorder %s44, 2
      %s46 = scalar_select %p45, 0, %s44
      %s47 = ssub.s32 %s34, %s46
      %p48 = scmp.eq.s32.totalorder %s47, 0
      %s50 = sadd.s32 %s49, 1
      %s51 = scalar_select %p48, %s49, %s50
      %p54 = pneg %p48
      %p55 = scmp.eq.s32.totalorder %s27, 3
      %p56 = por %p54, %p55
      %p57 = scmp.ne.s32.totalorder %s49, %s52
      %p58 = scmp.eq.s32.totalorder %s27, 0
      %p59 = por %p57, %p58
      %p60 = scmp.ne.s32.totalorder %s49, %s52
      %p61 = scmp.eq.s32.totalorder %s32, 3
      %p62 = por %p60, %p61
      %p63 = scmp.ne.s32.totalorder %s52, %s53
      %p64 = scmp.eq.s32.totalorder %s32, 0
      %p65 = por %p63, %p64
      %p66 = scmp.ne.s32.totalorder %s52, %s53
      %p67 = scmp.eq.s32.totalorder %s33, 3
      %p68 = por %p66, %p67
      %p70 = scmp.ne.s32.totalorder %s53, %s69
      %p71 = scmp.eq.s32.totalorder %s33, 0
      %p72 = por %p70, %p71
      %s73 = ssub.s32 %s34, %s46
      %s74 = ssub.s32 %s35, %s42
      %s75 = sor.u32 %s73, %s74
      %p76 = scmp.eq.s32.totalorder %s75, 0
      %s78 = sadd.s32 %s77, 1
      %s79 = scalar_select %p76, %s77, %s78
      %p82 = pneg %p76
      %p83 = scmp.eq.s32.totalorder %s27, 3
      %p84 = por %p82, %p83
      %p85 = scmp.ne.s32.totalorder %s77, %s80
      %p86 = scmp.eq.s32.totalorder %s27, 0
      %p87 = por %p85, %p86
      %p88 = scmp.ne.s32.totalorder %s77, %s80
      %p89 = scmp.eq.s32.totalorder %s32, 3
      %p90 = por %p88, %p89
      %p91 = scmp.ne.s32.totalorder %s80, %s81
      %p92 = scmp.eq.s32.totalorder %s32, 0
      %p93 = por %p91, %p92
      %p94 = scmp.ne.s32.totalorder %s80, %s81
      %p95 = scmp.eq.s32.totalorder %s33, 3
      %p96 = por %p94, %p95
      %p98 = scmp.ne.s32.totalorder %s81, %s97
      %p99 = scmp.eq.s32.totalorder %s33, 0
      %p100 = por %p98, %p99
      %s102 = sadd.s32 %s101, 1
      %p105 = scmp.eq.s32.totalorder %s27, 3
      %p106 = scmp.ne.s32.totalorder %s101, %s103
      %p107 = scmp.eq.s32.totalorder %s27, 0
      %p108 = por %p106, %p107
      %p109 = scmp.ne.s32.totalorder %s101, %s103
      %p110 = scmp.eq.s32.totalorder %s32, 3
      %p111 = por %p109, %p110
      %p112 = scmp.ne.s32.totalorder %s103, %s104
      %p113 = scmp.eq.s32.totalorder %s32, 0
      %p114 = por %p112, %p113
      %p115 = scmp.ne.s32.totalorder %s103, %s104
      %p116 = scmp.eq.s32.totalorder %s33, 3
      %p117 = por %p115, %p116
      %p119 = scmp.ne.s32.totalorder %s104, %s118
      %p120 = scmp.eq.s32.totalorder %s33, 0
      %p121 = por %p119, %p120
      %s123 = sadd.s32 %s122, 1
      %p126 = scmp.eq.s32.totalorder %s27, 3
      %p127 = scmp.ne.s32.totalorder %s122, %s124
      %p128 = scmp.eq.s32.totalorder %s27, 0
      %p129 = por %p127, %p128
      %p130 = scmp.ne.s32.totalorder %s122, %s124
      %p131 = scmp.eq.s32.totalorder %s32, 3
      %p132 = por %p130, %p131
      %p133 = scmp.ne.s32.totalorder %s124, %s125
      %p134 = scmp.eq.s32.totalorder %s32, 0
      %p135 = por %p133, %p134
      %p136 = scmp.ne.s32.totalorder %s124, %s125
      %p137 = scmp.eq.s32.totalorder %s33, 3
      %p138 = por %p136, %p137
      %p140 = scmp.ne.s32.totalorder %s125, %s139
      %p141 = scmp.eq.s32.totalorder %s33, 0
      %p142 = por %p140, %p141
      %s144 = sadd.s32 %s143, 1
      %p147 = scmp.eq.s32.totalorder %s27, 3
      %p148 = scmp.ne.s32.totalorder %s143, %s145
      %p149 = scmp.eq.s32.totalorder %s27, 0
      %p150 = por %p148, %p149
      %p151 = scmp.ne.s32.totalorder %s143, %s145
      %p152 = scmp.eq.s32.totalorder %s32, 3
      %p153 = por %p151, %p152
      %p154 = scmp.ne.s32.totalorder %s145, %s146
      %p155 = scmp.eq.s32.totalorder %s32, 0
      %p156 = por %p154, %p155
      %p157 = scmp.ne.s32.totalorder %s145, %s146
      %p158 = scmp.eq.s32.totalorder %s33, 3
      %p159 = por %p157, %p158
      %p161 = scmp.ne.s32.totalorder %s146, %s160
      %p162 = scmp.eq.s32.totalorder %s33, 0
      %p163 = por %p161, %p162
      %s165 = sadd.s32 %s164, 1
      %p168 = scmp.eq.s32.totalorder %s27, 3
      %p169 = scmp.ne.s32.totalorder %s164, %s166
      %p170 = scmp.eq.s32.totalorder %s27, 0
      %p171 = por %p169, %p170
      %p172 = scmp.ne.s32.totalorder %s164, %s166
      %p173 = scmp.eq.s32.totalorder %s32, 3
      %p174 = por %p172, %p173
      %p175 = scmp.ne.s32.totalorder %s166, %s167
      %p176 = scmp.eq.s32.totalorder %s32, 0
      %p177 = por %p175, %p176
      %p178 = scmp.ne.s32.totalorder %s166, %s167
      %p179 = scmp.eq.s32.totalorder %s33, 3
      %p180 = por %p178, %p179
      %p182 = scmp.ne.s32.totalorder %s167, %s181
      %p183 = scmp.eq.s32.totalorder %s33, 0
      %p184 = por %p182, %p183
      %s186 = sadd.s32 %s185, 1
      %p189 = scmp.eq.s32.totalorder %s27, 3
      %p190 = scmp.ne.s32.totalorder %s185, %s187
      %p191 = scmp.eq.s32.totalorder %s27, 0
      %p192 = por %p190, %p191
      %p193 = scmp.ne.s32.totalorder %s185, %s187
      %p194 = scmp.eq.s32.totalorder %s32, 3
      %p195 = por %p193, %p194
      %p196 = scmp.ne.s32.totalorder %s187, %s188
      %p197 = scmp.eq.s32.totalorder %s32, 0
      %p198 = por %p196, %p197
      %p199 = scmp.ne.s32.totalorder %s187, %s188
      %p200 = scmp.eq.s32.totalorder %s33, 3
      %p201 = por %p199, %p200
      %p203 = scmp.ne.s32.totalorder %s188, %s202
      %p204 = scmp.eq.s32.totalorder %s33, 0
      %p205 = por %p203, %p204
      %s207 = sadd.s32 %s206, 1
      %p210 = scmp.eq.s32.totalorder %s27, 3
      %p211 = scmp.ne.s32.totalorder %s206, %s208
      %p212 = scmp.eq.s32.totalorder %s27, 0
      %p213 = por %p211, %p212
      %p214 = scmp.ne.s32.totalorder %s206, %s208
      %p215 = scmp.eq.s32.totalorder %s32, 3
      %p216 = por %p214, %p215
      %p217 = scmp.ne.s32.totalorder %s208, %s209
      %p218 = scmp.eq.s32.totalorder %s32, 0
      %p219 = por %p217, %p218
      %p220 = scmp.ne.s32.totalorder %s208, %s209
      %p221 = scmp.eq.s32.totalorder %s33, 3
      %p222 = por %p220, %p221
      %p224 = scmp.ne.s32.totalorder %s209, %s223
      %p225 = scmp.eq.s32.totalorder %s33, 0
      %p226 = por %p224, %p225
      %s228 = sadd.s32 %s227, 1
      %p231 = scmp.eq.s32.totalorder %s27, 3
      %p232 = scmp.ne.s32.totalorder %s227, %s229
      %p233 = scmp.eq.s32.totalorder %s27, 0
      %p234 = por %p232, %p233
      %p235 = scmp.ne.s32.totalorder %s227, %s229
      %p236 = scmp.eq.s32.totalorder %s32, 3
      %p237 = por %p235, %p236
      %p238 = scmp.ne.s32.totalorder %s229, %s230
      %p239 = scmp.eq.s32.totalorder %s32, 0
      %p240 = por %p238, %p239
      %p241 = scmp.ne.s32.totalorder %s229, %s230
      %p242 = scmp.eq.s32.totalorder %s33, 3
      %p243 = por %p241, %p242
      %p245 = scmp.ne.s32.totalorder %s230, %s244
      %p246 = scmp.eq.s32.totalorder %s33, 0
      %p247 = por %p245, %p246
      %s248 = ssub.s32 %s34, %s46
      %p249 = scmp.eq.s32.totalorder %s248, 0
      %s251 = sadd.s32 %s250, 1
      %s252 = scalar_select %p249, %s250, %s251
      %p255 = pneg %p249
      %p256 = scmp.eq.s32.totalorder %s27, 3
      %p257 = por %p255, %p256
      %p258 = scmp.ne.s32.totalorder %s250, %s253
      %p259 = scmp.eq.s32.totalorder %s27, 0
      %p260 = por %p258, %p259
      %p261 = scmp.ne.s32.totalorder %s250, %s253
      %p262 = scmp.eq.s32.totalorder %s32, 3
      %p263 = por %p261, %p262
      %p264 = scmp.ne.s32.totalorder %s253, %s254
      %p265 = scmp.eq.s32.totalorder %s32, 0
      %p266 = por %p264, %p265
      %p267 = scmp.ne.s32.totalorder %s253, %s254
      %p268 = scmp.eq.s32.totalorder %s33, 3
      %p269 = por %p267, %p268
      %p271 = scmp.ne.s32.totalorder %s254, %s270
      %p272 = scmp.eq.s32.totalorder %s33, 0
      %p273 = por %p271, %p272
      %p274 = scmp.le.s32.totalorder 1, %s27
      %p275 = scmp.lt.s32.totalorder %s27, 5
      %p276 = pnand %p274, %p275
      %p277 = pneg %p276
      // Predicated region
      $region9: #{tpu_custom_call.1} parent=5 // pred_check
        _
      $region10: #{tpu_custom_call.1} parent=5 // pred_check_branch
        %279 = sbr.rel (%p276) target = $region12
      $region11: #{tpu_custom_call.1} parent=5 // pred_region
        %s280 = ssub.s32 %s27, 1
        // Predicated region
        $region13: #{tpu_custom_call.1} parent=11 // pred_check
          %p281 = pneg %p114
        $region14: #{tpu_custom_call.1} parent=11 // pred_check_branch
          %283 = sbr.rel (%p281) target = $region16
        $region15: #{tpu_custom_call.1} parent=11 // pred_region
          %s285 = ssub.s32 1024, 1024
          %286 = vsyncadd [#allocation9], %s285
          %s287 = sshll.u32 [#allocation10], 4
          %s288 = int_to_ptr.vmem [resolvable:$true] %s287
          %293 = dma.hbm_to_vmem [thread:$0]  %s2, 1024, %s288, [#allocation9], 128, 128, 8
        $region16: #{tpu_custom_call.1} parent=11 // pred_fallthru
          _
        // Predicated region
        $region17: #{tpu_custom_call.1} parent=11 // pred_check
          %p294 = pneg %p135
        $region18: #{tpu_custom_call.1} parent=11 // pred_check_branch
          %296 = sbr.rel (%p294) target = $region20
        $region19: #{tpu_custom_call.1} parent=11 // pred_region
          %s298 = ssub.s32 1024, 1024
          %299 = vsyncadd [#allocation12], %s298
          %s300 = sshll.u32 [#allocation11], 4
          %s301 = int_to_ptr.vmem [resolvable:$true] %s300
          %306 = dma.hbm_to_vmem [thread:$0]  %s3, 1024, %s301, [#allocation12], 128, 128, 8
        $region20: #{tpu_custom_call.1} parent=11 // pred_fallthru
          _
        // Predicated region
        $region21: #{tpu_custom_call.1} parent=11 // pred_check
          %p307 = pneg %p156
        $region22: #{tpu_custom_call.1} parent=11 // pred_check_branch
          %309 = sbr.rel (%p307) target = $region24
        $region23: #{tpu_custom_call.1} parent=11 // pred_region
          %s311 = ssub.s32 256, 256
          %312 = vsyncadd [#allocation12], %s311
          %s313 = sshll.u32 [#allocation13], 4
          %s314 = int_to_ptr.vmem [resolvable:$true] %s313
          %319 = dma.hbm_to_vmem [thread:$0]  %s4, 256, %s314, [#allocation12], 64, 64, 4
        $region24: #{tpu_custom_call.1} parent=11 // pred_fallthru
          _
        // Predicated region
        $region25: #{tpu_custom_call.1} parent=11 // pred_check
          %p320 = pneg %p177
        $region26: #{tpu_custom_call.1} parent=11 // pred_check_branch
          %322 = sbr.rel (%p320) target = $region28
        $region27: #{tpu_custom_call.1} parent=11 // pred_region
          %s324 = ssub.s32 16, 16
          %325 = vsyncadd [#allocation15], %s324
          %s327 = sshll.u32 [#allocation14], 4
          %s328 = int_to_ptr.vmem [resolvable:$true] %s327
          %330 = dma.hbm_to_vmem [thread:$0]  %s5, 16, %s328, [#allocation15]
        $region28: #{tpu_custom_call.1} parent=11 // pred_fallthru
          _
        // Predicated region
        $region29: #{tpu_custom_call.1} parent=11 // pred_check
          %p331 = pneg %p198
        $region30: #{tpu_custom_call.1} parent=11 // pred_check_branch
          %333 = sbr.rel (%p331) target = $region32
        $region31: #{tpu_custom_call.1} parent=11 // pred_region
          %s335 = ssub.s32 1024, 1024
          %336 = vsyncadd [#allocation15], %s335
          %s337 = sshll.u32 [#allocation16], 4
          %s338 = int_to_ptr.vmem [resolvable:$true] %s337
          %343 = dma.hbm_to_vmem [thread:$0]  %s6, 1024, %s338, [#allocation15], 128, 128, 8
        $region32: #{tpu_custom_call.1} parent=11 // pred_fallthru
          _
        // Predicated region
        $region33: #{tpu_custom_call.1} parent=11 // pred_check
          %p344 = pneg %p219
        $region34: #{tpu_custom_call.1} parent=11 // pred_check_branch
          %346 = sbr.rel (%p344) target = $region36
        $region35: #{tpu_custom_call.1} parent=11 // pred_region
          %s348 = ssub.s32 512, 512
          %349 = vsyncadd [#allocation18], %s348
          %s350 = sshll.u32 [#allocation17], 4
          %s351 = int_to_ptr.vmem [resolvable:$true] %s350
          %356 = dma.hbm_to_vmem [thread:$0]  %s7, 512, %s351, [#allocation18], 128, 128, 8
        $region36: #{tpu_custom_call.1} parent=11 // pred_fallthru
          _
        // Predicated region
        $region37: #{tpu_custom_call.1} parent=11 // pred_check
          %p357 = pneg %p240
        $region38: #{tpu_custom_call.1} parent=11 // pred_check_branch
          %359 = sbr.rel (%p357) target = $region40
        $region39: #{tpu_custom_call.1} parent=11 // pred_region
          %s361 = ssub.s32 16, 16
          %362 = vsyncadd [#allocation18], %s361
          %s364 = sshll.u32 [#allocation19], 4
          %s365 = int_to_ptr.vmem [resolvable:$true] %s364
          %367 = dma.hbm_to_vmem [thread:$0]  %s8, 16, %s365, [#allocation18]
        $region40: #{tpu_custom_call.1} parent=11 // pred_fallthru
          _
      $region12: #{tpu_custom_call.1} parent=5 // pred_fallthru
        _
      %p368 = scmp.lt.s32.totalorder %s27, 4
      // Predicated region
      $region41: #{tpu_custom_call.1} parent=5 // pred_check
        %p369 = pneg %p368
      $region42: #{tpu_custom_call.1} parent=5 // pred_check_branch
        %371 = sbr.rel (%p369) target = $region44
      $region43: #{tpu_custom_call.1} parent=5 // pred_region
        // Predicated region
        $region45: #{tpu_custom_call.1} parent=43 // pred_check
          %p372 = pneg %p59
        $region46: #{tpu_custom_call.1} parent=43 // pred_check_branch
          %374 = sbr.rel (%p372) target = $region48
        $region47: #{tpu_custom_call.1} parent=43 // pred_region
          %s375 = sand.u32 %s49, 1
          %s376 = scalar_lea.sflag [#allocation6], %s375
          %s377 = sand.u32 %s49, 1
          %s378 = smul.addr %s377, 16
          %s379 = scalar_lea.vmem [#allocation5], %s378
          %s381 = ssub.s32 256, 256
          %382 = vsyncadd %s376, %s381
          %s383 = smul.addr %s34, 2
          %s384 = smul.addr %s383, 128
          %s385 = scalar_lea.hbm %s0, %s384
          %s386 = sshll.u32 %s379, 4
          %s387 = int_to_ptr.vmem [resolvable:$true] %s386
          %392 = dma.hbm_to_vmem [thread:$0]  %s385, 256, %s387, %s376, 128, 128, 8
        $region48: #{tpu_custom_call.1} parent=43 // pred_fallthru
          _
        // Predicated region
        $region49: #{tpu_custom_call.1} parent=43 // pred_check
          %p393 = pneg %p87
        $region50: #{tpu_custom_call.1} parent=43 // pred_check_branch
          %395 = sbr.rel (%p393) target = $region52
        $region51: #{tpu_custom_call.1} parent=43 // pred_region
          %s396 = sand.u32 %s27, 1
          %s397 = scalar_lea.sflag [#allocation9], %s396
          %s398 = sand.u32 %s77, 1
          %s399 = smul.addr %s398, 128
          %s400 = scalar_lea.vmem [#allocation8], %s399
          %s401 = smul.u32 8, %s35
          %s403 = ssub.s32 2048, 2048
          %404 = vsyncadd %s397, %s403
          %s405 = smul.addr %s401, 2
          %s406 = smul.addr %s34, 32
          %s407 = sadd.s32 %s405, %s406
          %s408 = smul.addr %s407, 128
          %s409 = scalar_lea.hbm %s1, %s408
          %s410 = sshll.u32 %s400, 4
          %s411 = int_to_ptr.vmem [resolvable:$true] %s410
          %416 = dma.hbm_to_vmem [thread:$0]  %s409, 2048, %s411, %s397, 128, 128, 8
        $region52: #{tpu_custom_call.1} parent=43 // pred_fallthru
          _
      $region44: #{tpu_custom_call.1} parent=5 // pred_fallthru
        _
      %p417 = scmp.le.s32.totalorder 1, %s27
      %p418 = scmp.lt.s32.totalorder %s27, 5
      %p419 = pnand %p417, %p418
      %p420 = pneg %p419
      // Predicated region
      $region53: #{tpu_custom_call.1} parent=5 // pred_check
        _
      $region54: #{tpu_custom_call.1} parent=5 // pred_check_branch
        %422 = sbr.rel (%p419) target = $region56
      $region55: #{tpu_custom_call.1} parent=5 // pred_region
        %s423 = ssub.s32 %s27, 1
        %s424 = sand.u32 %s52, 1
        %s425 = scalar_lea.sflag [#allocation6], %s424
        %s426 = sand.u32 %s52, 1
        %s427 = smul.addr %s426, 16
        %s428 = scalar_lea.vmem [#allocation5], %s427
        // Predicated region
        $region57: #{tpu_custom_call.1} parent=55 // pred_check
          %p429 = pneg %p65
        $region58: #{tpu_custom_call.1} parent=55 // pred_check_branch
          %431 = sbr.rel (%p429) target = $region60
        $region59: #{tpu_custom_call.1} parent=55 // pred_region
          %432 = dma.done %s425, 256
        $region60: #{tpu_custom_call.1} parent=55 // pred_fallthru
          _
        %s433 = sand.u32 %s32, 1
        %s434 = scalar_lea.sflag [#allocation9], %s433
        %s435 = sand.u32 %s80, 1
        %s436 = smul.addr %s435, 128
        %s437 = scalar_lea.vmem [#allocation8], %s436
        // Predicated region
        $region61: #{tpu_custom_call.1} parent=55 // pred_check
          %p438 = pneg %p93
        $region62: #{tpu_custom_call.1} parent=55 // pred_check_branch
          %440 = sbr.rel (%p438) target = $region64
        $region63: #{tpu_custom_call.1} parent=55 // pred_region
          %441 = dma.done %s434, 2048
        $region64: #{tpu_custom_call.1} parent=55 // pred_fallthru
          _
        // Predicated region
        $region65: #{tpu_custom_call.1} parent=55 // pred_check
          %p442 = pneg %p114
        $region66: #{tpu_custom_call.1} parent=55 // pred_check_branch
          %444 = sbr.rel (%p442) target = $region68
        $region67: #{tpu_custom_call.1} parent=55 // pred_region
          %445 = dma.done [#allocation9], 1024
        $region68: #{tpu_custom_call.1} parent=55 // pred_fallthru
          _
        // Predicated region
        $region69: #{tpu_custom_call.1} parent=55 // pred_check
          %p446 = pneg %p135
        $region70: #{tpu_custom_call.1} parent=55 // pred_check_branch
          %448 = sbr.rel (%p446) target = $region72
        $region71: #{tpu_custom_call.1} parent=55 // pred_region
          %449 = dma.done [#allocation12], 1024
        $region72: #{tpu_custom_call.1} parent=55 // pred_fallthru
          _
        // Predicated region
        $region73: #{tpu_custom_call.1} parent=55 // pred_check
          %p450 = pneg %p156
        $region74: #{tpu_custom_call.1} parent=55 // pred_check_branch
          %452 = sbr.rel (%p450) target = $region76
        $region75: #{tpu_custom_call.1} parent=55 // pred_region
          %453 = dma.done [#allocation12], 256
        $region76: #{tpu_custom_call.1} parent=55 // pred_fallthru
          _
        // Predicated region
        $region77: #{tpu_custom_call.1} parent=55 // pred_check
          %p454 = pneg %p177
        $region78: #{tpu_custom_call.1} parent=55 // pred_check_branch
          %456 = sbr.rel (%p454) target = $region80
        $region79: #{tpu_custom_call.1} parent=55 // pred_region
          %457 = dma.done [#allocation15], 16
        $region80: #{tpu_custom_call.1} parent=55 // pred_fallthru
          _
        // Predicated region
        $region81: #{tpu_custom_call.1} parent=55 // pred_check
          %p458 = pneg %p198
        $region82: #{tpu_custom_call.1} parent=55 // pred_check_branch
          %460 = sbr.rel (%p458) target = $region84
        $region83: #{tpu_custom_call.1} parent=55 // pred_region
          %461 = dma.done [#allocation15], 1024
        $region84: #{tpu_custom_call.1} parent=55 // pred_fallthru
          _
        // Predicated region
        $region85: #{tpu_custom_call.1} parent=55 // pred_check
          %p462 = pneg %p219
        $region86: #{tpu_custom_call.1} parent=55 // pred_check_branch
          %464 = sbr.rel (%p462) target = $region88
        $region87: #{tpu_custom_call.1} parent=55 // pred_region
          %465 = dma.done [#allocation18], 512
        $region88: #{tpu_custom_call.1} parent=55 // pred_fallthru
          _
        // Predicated region
        $region89: #{tpu_custom_call.1} parent=55 // pred_check
          %p466 = pneg %p240
        $region90: #{tpu_custom_call.1} parent=55 // pred_check_branch
          %468 = sbr.rel (%p466) target = $region92
        $region91: #{tpu_custom_call.1} parent=55 // pred_region
          %469 = dma.done [#allocation18], 16
        $region92: #{tpu_custom_call.1} parent=55 // pred_fallthru
          _
        %s470 = sand.u32 %s52, 1
        %s471 = scalar_lea.sflag [#allocation6], %s470
        %s472 = sand.u32 %s52, 1
        %s473 = smul.addr %s472, 16
        %s474 = scalar_lea.vmem [#allocation5], %s473
        %p475 = pneg %p65
        %p476 = pneg %p62
        %s477 = sand.u32 %s32, 1
        %s478 = scalar_lea.sflag [#allocation9], %s477
        %s479 = sand.u32 %s80, 1
        %s480 = smul.addr %s479, 128
        %s481 = scalar_lea.vmem [#allocation8], %s480
        %p482 = pneg %p93
        %p483 = pneg %p90
        %p484 = pneg %p114
        %p485 = pneg %p111
        %p486 = pneg %p135
        %p487 = pneg %p132
        %p488 = pneg %p156
        %p489 = pneg %p153
        %p490 = pneg %p177
        %p491 = pneg %p174
        %p492 = pneg %p198
        %p493 = pneg %p195
        %p494 = pneg %p219
        %p495 = pneg %p216
        %p496 = pneg %p240
        %p497 = pneg %p237
        %p498 = pneg %p266
        %p499 = pneg %p263
        %s500 = sand.u32 %s253, 1
        %s501 = scalar_lea.sflag [#allocation7], %s500
        %s502 = sand.u32 %s253, 1
        %s503 = smul.addr %s502, 16
        %s504 = scalar_lea.vmem [#allocation20], %s503
        %s505 = smul.u32 8, %s37
        %p507 = scmp.eq.s32.totalorder %s37, 0
        // Predicated region
        $region93: #{tpu_custom_call.1} parent=55 // pred_check
          %p508 = pneg %p507
        $region94: #{tpu_custom_call.1} parent=55 // pred_check_branch
          %510 = sbr.rel (%p508) target = $region96
        $region95: #{tpu_custom_call.1} parent=55 // pred_region
          %v511 = vld [vmem:[%s428] sm:$0xff]
          %v512 = vld [vmem:[%s428 + $0x8] sm:$0xff]
          %v513 = vld [vmem:[#allocation10] sm:$0xff]
          %v514 = vld [vmem:[#allocation10 + $0x8] sm:$0xff]
          %v515 = vld [vmem:[#allocation10 + $0x10] sm:$0xff]
          %v516 = vld [vmem:[#allocation10 + $0x18] sm:$0xff]
          %v517 = vld [vmem:[#allocation10 + $0x20] sm:$0xff]
          %v518 = vld [vmem:[#allocation10 + $0x28] sm:$0xff]
          %v519 = vld [vmem:[#allocation10 + $0x30] sm:$0xff]
          %v520 = vld [vmem:[#allocation10 + $0x38] sm:$0xff]
          %vm521 = vcmask 523264
          %v523 = vsel %vm521, %v511, 0
          %v526 = vsel %vm521, %v512, 0
          %528 = vmatprep.subr.mxu0 0.0
          %529 = vmatpush1.msra.mxu0 %v513
          %530 = vmatprep.subr.mxu0 0.0
          %531 = vmatpush1.msra.mxu0 %v514
          %532 = vmatprep.subr.mxu0 0.0
          %533 = vmatpush1.msra.mxu0 %v515
          %534 = vmatprep.subr.mxu0 0.0
          %535 = vmatpush1.msra.mxu0 %v516
          %536 = vmatprep.subr.mxu0 0.0
          %537 = vmatpush1.msra.mxu0 %v517
          %538 = vmatprep.subr.mxu0 0.0
          %539 = vmatpush1.msra.mxu0 %v518
          %540 = vmatprep.subr.mxu0 0.0
          %541 = vmatpush1.msra.mxu0 %v519
          %542 = vmatprep.subr.mxu0 0.0
          %543 = vmatpush1.msra.mxu0 %v520
          %544 = vmatprep.subr.mxu0 0.0
          %545 = vmatpush1.msra.mxu0 0.0
          %546 = vmatprep.subr.mxu0 0.0
          %547 = vmatpush1.msra.mxu0 0.0
          %548 = vmatprep.subr.mxu0 0.0
          %549 = vmatpush1.msra.mxu0 0.0
          %550 = vmatprep.subr.mxu0 0.0
          %551 = vmatpush1.msra.mxu0 0.0
          %552 = vmatprep.subr.mxu0 0.0
          %553 = vmatpush1.msra.mxu0 0.0
          %554 = vmatprep.subr.mxu0 0.0
          %555 = vmatpush1.msra.mxu0 0.0
          %556 = vmatprep.subr.mxu0 0.0
          %557 = vmatpush1.msra.mxu0 0.0
          %558 = vmatprep.subr.mxu0 0.0
          %559 = vmatpush1.msra.mxu0 0.0
          %560 = vmatprep.subr.mxu0 0.0
          %561 = vmatpush1.msra.mxu0 0.0
          %562 = vmatprep.subr.mxu0 0.0
          %563 = vmatpush1.msra.mxu0 0.0
          %564 = vmatprep.subr.mxu0 0.0
          %565 = vmatpush1.msra.mxu0 0.0
          %566 = vmatprep.subr.mxu0 0.0
          %567 = vmatpush1.msra.mxu0 0.0
          %568 = vmatprep.subr.mxu0 0.0
          %569 = vmatpush1.msra.mxu0 0.0
          %570 = vmatprep.subr.mxu0 0.0
          %571 = vmatpush1.msra.mxu0 0.0
          %572 = vmatprep.subr.mxu0 0.0
          %573 = vmatpush1.msra.mxu0 0.0
          %574 = vmatprep.subr.mxu0 0.0
          %575 = vmatpush1.msra.mxu0 0.0
          %576 = vmatprep.subr.mxu0 0.0
          %577 = vmatpush1.msra.mxu0 0.0
          %578 = vmatprep.subr.mxu0 0.0
          %579 = vmatpush1.msra.mxu0 0.0
          %580 = vmatprep.subr.mxu0 0.0
          %581 = vmatpush1.msra.mxu0 0.0
          %582 = vmatprep.subr.mxu0 0.0
          %583 = vmatpush1.msra.mxu0 0.0
          %584 = vmatprep.subr.mxu0 0.0
          %585 = vmatpush1.msra.mxu0 0.0
          %586 = vmatprep.subr.mxu0 0.0
          %587 = vmatpush1.msra.mxu0 0.0
          %588 = vmatprep.subr.mxu0 0.0
          %589 = vmatpush1.msra.mxu0 0.0
          %590 = vmatprep.subr.mxu0 0.0
          %591 = vmatpush1.msra.mxu0 0.0
          %592 = vmatprep.mubr.f32.mxu0 0.0
          %593 = vmatmul.mubr.f32.gmra.mrb[0].mxu0 %v523
          %v594 = vpop.f32.mrb[0].mxu0
          %v595 = vadd.f32 0.0, %v594
          %v596 = vpop.f32.mrb[0].mxu0
          %597 = vmatprep.mubr.f32.mxu0 0.0
          %598 = vmatmul.mubr.f32.gmra.mrb[0].mxu0 %v526
          %v599 = vpop.f32.mrb[0].mxu0
          %v600 = vadd.f32 0.0, %v599
          %v601 = vpop.f32.mrb[0].mxu0
          %602 = vdwg.mxu0
          %vm603 = vcmask 261120
          %604 = vst.msk [vmem:[#allocation2] sm:$0xff] %vm603, %v595
          %605 = vst.msk [vmem:[#allocation2 + $0x8] sm:$0xff] %vm603, %v600
          %v606 = vld [vmem:[#allocation11] sm:$0xff]
          %v607 = vld [vmem:[#allocation11 + $0x8] sm:$0xff]
          %v608 = vld [vmem:[#allocation11 + $0x10] sm:$0xff]
          %v609 = vld [vmem:[#allocation11 + $0x18] sm:$0xff]
          %v610 = vld [vmem:[#allocation11 + $0x20] sm:$0xff]
          %v611 = vld [vmem:[#allocation11 + $0x28] sm:$0xff]
          %v612 = vld [vmem:[#allocation11 + $0x30] sm:$0xff]
          %v613 = vld [vmem:[#allocation11 + $0x38] sm:$0xff]
          %v614 = vld [vmem:[#allocation14] sm:$0x1]
          %v616 = vlaneseq
          %v617 = vshrl.u32 %v616, 7
          %v618 = vsub.s32 0, %v617
          %v619 = vrot.slane %v614, %v618
          %621 = vmatprep.subr.mxu0 0.0
          %622 = vmatpush1.msra.mxu0 %v606
          %623 = vmatprep.subr.mxu0 0.0
          %624 = vmatpush1.msra.mxu0 %v607
          %625 = vmatprep.subr.mxu0 0.0
          %626 = vmatpush1.msra.mxu0 %v608
          %627 = vmatprep.subr.mxu0 0.0
          %628 = vmatpush1.msra.mxu0 %v609
          %629 = vmatprep.subr.mxu0 0.0
          %630 = vmatpush1.msra.mxu0 %v610
          %631 = vmatprep.subr.mxu0 0.0
          %632 = vmatpush1.msra.mxu0 %v611
          %633 = vmatprep.subr.mxu0 0.0
          %634 = vmatpush1.msra.mxu0 %v612
          %635 = vmatprep.subr.mxu0 0.0
          %636 = vmatpush1.msra.mxu0 %v613
          %637 = vmatprep.subr.mxu0 0.0
          %638 = vmatpush1.msra.mxu0 0.0
          %639 = vmatprep.subr.mxu0 0.0
          %640 = vmatpush1.msra.mxu0 0.0
          %641 = vmatprep.subr.mxu0 0.0
          %642 = vmatpush1.msra.mxu0 0.0
          %643 = vmatprep.subr.mxu0 0.0
          %644 = vmatpush1.msra.mxu0 0.0
          %645 = vmatprep.subr.mxu0 0.0
          %646 = vmatpush1.msra.mxu0 0.0
          %647 = vmatprep.subr.mxu0 0.0
          %648 = vmatpush1.msra.mxu0 0.0
          %649 = vmatprep.subr.mxu0 0.0
          %650 = vmatpush1.msra.mxu0 0.0
          %651 = vmatprep.subr.mxu0 0.0
          %652 = vmatpush1.msra.mxu0 0.0
          %653 = vmatprep.subr.mxu0 0.0
          %654 = vmatpush1.msra.mxu0 0.0
          %655 = vmatprep.subr.mxu0 0.0
          %656 = vmatpush1.msra.mxu0 0.0
          %657 = vmatprep.subr.mxu0 0.0
          %658 = vmatpush1.msra.mxu0 0.0
          %659 = vmatprep.subr.mxu0 0.0
          %660 = vmatpush1.msra.mxu0 0.0
          %661 = vmatprep.subr.mxu0 0.0
          %662 = vmatpush1.msra.mxu0 0.0
          %663 = vmatprep.subr.mxu0 0.0
          %664 = vmatpush1.msra.mxu0 0.0
          %665 = vmatprep.subr.mxu0 0.0
          %666 = vmatpush1.msra.mxu0 0.0
          %667 = vmatprep.subr.mxu0 0.0
          %668 = vmatpush1.msra.mxu0 0.0
          %669 = vmatprep.subr.mxu0 0.0
          %670 = vmatpush1.msra.mxu0 0.0
          %671 = vmatprep.subr.mxu0 0.0
          %672 = vmatpush1.msra.mxu0 0.0
          %673 = vmatprep.subr.mxu0 0.0
          %674 = vmatpush1.msra.mxu0 0.0
          %675 = vmatprep.subr.mxu0 0.0
          %676 = vmatpush1.msra.mxu0 0.0
          %677 = vmatprep.subr.mxu0 0.0
          %678 = vmatpush1.msra.mxu0 0.0
          %679 = vmatprep.subr.mxu0 0.0
          %680 = vmatpush1.msra.mxu0 0.0
          %681 = vmatprep.subr.mxu0 0.0
          %682 = vmatpush1.msra.mxu0 0.0
          %683 = vmatprep.subr.mxu0 0.0
          %684 = vmatpush1.msra.mxu0 0.0
          %685 = vmatprep.mubr.f32.mxu0 0.0
          %686 = vmatmul.mubr.f32.gmra.mrb[0].mxu0 %v523
          %v687 = vpop.f32.mrb[0].mxu0
          %v688 = vadd.f32 %v619, %v687
          %v689 = vpop.f32.mrb[0].mxu0
          %690 = vmatprep.mubr.f32.mxu0 0.0
          %691 = vmatmul.mubr.f32.gmra.mrb[0].mxu0 %v526
          %v692 = vpop.f32.mrb[0].mxu0
          %v693 = vadd.f32 %v619, %v692
          %v694 = vpop.f32.mrb[0].mxu0
          %695 = vdwg.mxu0
          %696 = vst.msk [vmem:[#allocation3] sm:$0xff] %vm603, %v688
          %697 = vst.msk [vmem:[#allocation3 + $0x8] sm:$0xff] %vm603, %v693
          %698 = vst.msk [vmem:[#allocation4] sm:$0xff] %vm603, 0.0
          %699 = vst.msk [vmem:[#allocation4 + $0x8] sm:$0xff] %vm603, 0.0
        $region96: #{tpu_custom_call.1} parent=55 // pred_fallthru
          _
        %v700 = vld [vmem:[%s437] sm:$0xff]
        %v701 = vld [vmem:[%s437 + $0x8] sm:$0xff]
        %v702 = vld [vmem:[%s437 + $0x10] sm:$0xff]
        %v703 = vld [vmem:[%s437 + $0x18] sm:$0xff]
        %v704 = vld [vmem:[%s437 + $0x20] sm:$0xff]
        %v705 = vld [vmem:[%s437 + $0x28] sm:$0xff]
        %v706 = vld [vmem:[%s437 + $0x30] sm:$0xff]
        %v707 = vld [vmem:[%s437 + $0x38] sm:$0xff]
        %v708 = vld [vmem:[%s437 + $0x40] sm:$0xff]
        %v709 = vld [vmem:[%s437 + $0x48] sm:$0xff]
        %v710 = vld [vmem:[%s437 + $0x50] sm:$0xff]
        %v711 = vld [vmem:[%s437 + $0x58] sm:$0xff]
        %v712 = vld [vmem:[%s437 + $0x60] sm:$0xff]
        %v713 = vld [vmem:[%s437 + $0x68] sm:$0xff]
        %v714 = vld [vmem:[%s437 + $0x70] sm:$0xff]
        %v715 = vld [vmem:[%s437 + $0x78] sm:$0xff]
        %v716 = vpack.c.bf16 %v701, %v700
        %v717 = vpack.c.bf16 %v703, %v702
        %v718 = vpack.c.bf16 %v705, %v704
        %v719 = vpack.c.bf16 %v707, %v706
        %v720 = vpack.c.bf16 %v709, %v708
        %v721 = vpack.c.bf16 %v711, %v710
        %v722 = vpack.c.bf16 %v713, %v712
        %v723 = vpack.c.bf16 %v715, %v714
        %v724 = vld [vmem:[#allocation13] sm:$0xf]
        %v725 = vld [vmem:[#allocation13 + $0x4] sm:$0xf]
        %v726 = vld [vmem:[#allocation13 + $0x8] sm:$0xf]
        %v727 = vld [vmem:[#allocation13 + $0xc] sm:$0xf]
        %v732 = vunpack.c.l.b16 %v724
        %v733 = vunpack.c.l.b16 %v725
        %v734 = vunpack.c.l.b16 %v726
        %v735 = vunpack.c.l.b16 %v727
        %v736 = vpack.c.b16 %v733, %v732
        %v737 = vpack.c.b16 %v735, %v734
        %vm740 = vcmask 261120
        %v742 = vsel %vm740, %v716, 0
        %v745 = vsel %vm740, %v717, 0
        %v748 = vsel %vm740, %v718, 0
        %v751 = vsel %vm740, %v719, 0
        %v754 = vsel %vm740, %v720, 0
        %v757 = vsel %vm740, %v721, 0
        %v760 = vsel %vm740, %v722, 0
        %v763 = vsel %vm740, %v723, 0
        %765 = vmatprep.subr.bf16.mxu0 0
        %766 = vmatpush1.bf16.msra.mxu0 %v736
        %767 = vmatprep.subr.bf16.mxu0 0
        %768 = vmatpush1.bf16.msra.mxu0 %v737
        %769 = vmatprep.subr.bf16.mxu0 0
        %770 = vmatpush1.bf16.msra.mxu0 0
        %771 = vmatprep.subr.bf16.mxu0 0
        %772 = vmatpush1.bf16.msra.mxu0 0
        %773 = vmatprep.subr.bf16.mxu0 0
        %774 = vmatpush1.bf16.msra.mxu0 0
        %775 = vmatprep.subr.bf16.mxu0 0
        %776 = vmatpush1.bf16.msra.mxu0 0
        %777 = vmatprep.subr.bf16.mxu0 0
        %778 = vmatpush1.bf16.msra.mxu0 0
        %779 = vmatprep.subr.bf16.mxu0 0
        %780 = vmatpush1.bf16.msra.mxu0 0
        %781 = vmatprep.subr.bf16.mxu0 0
        %782 = vmatpush1.bf16.msra.mxu0 0
        %783 = vmatprep.subr.bf16.mxu0 0
        %784 = vmatpush1.bf16.msra.mxu0 0
        %785 = vmatprep.subr.bf16.mxu0 0
        %786 = vmatpush1.bf16.msra.mxu0 0
        %787 = vmatprep.subr.bf16.mxu0 0
        %788 = vmatpush1.bf16.msra.mxu0 0
        %789 = vmatprep.subr.bf16.mxu0 0
        %790 = vmatpush1.bf16.msra.mxu0 0
        %791 = vmatprep.subr.bf16.mxu0 0
        %792 = vmatpush1.bf16.msra.mxu0 0
        %793 = vmatprep.subr.bf16.mxu0 0
        %794 = vmatpush1.bf16.msra.mxu0 0
        %795 = vmatprep.subr.bf16.mxu0 0
        %796 = vmatpush1.bf16.msra.mxu0 0
        %797 = vmatprep.mubr.bf16.mxu0 0
        %798 = vmatmul.mubr.bf16.gmra.mrb[0].mxu0 %v742
        %v799 = vpop.f32.mrb[0].mxu0
        %v800 = vadd.f32 0.0, %v799
        %v801 = vpop.f32.mrb[0].mxu0
        %v802 = vpop.f32.mrb[0].mxu0
        %v803 = vadd.f32 0.0, %v802
        %v804 = vpop.f32.mrb[0].mxu0
        %805 = vmatprep.mubr.bf16.mxu0 0
        %806 = vmatmul.mubr.bf16.gmra.mrb[0].mxu0 %v745
        %v807 = vpop.f32.mrb[0].mxu0
        %v808 = vadd.f32 0.0, %v807
        %v809 = vpop.f32.mrb[0].mxu0
        %v810 = vpop.f32.mrb[0].mxu0
        %v811 = vadd.f32 0.0, %v810
        %v812 = vpop.f32.mrb[0].mxu0
        %813 = vmatprep.mubr.bf16.mxu0 0
        %814 = vmatmul.mubr.bf16.gmra.mrb[0].mxu0 %v748
        %v815 = vpop.f32.mrb[0].mxu0
        %v816 = vadd.f32 0.0, %v815
        %v817 = vpop.f32.mrb[0].mxu0
        %v818 = vpop.f32.mrb[0].mxu0
        %v819 = vadd.f32 0.0, %v818
        %v820 = vpop.f32.mrb[0].mxu0
        %821 = vmatprep.mubr.bf16.mxu0 0
        %822 = vmatmul.mubr.bf16.gmra.mrb[0].mxu0 %v751
        %v823 = vpop.f32.mrb[0].mxu0
        %v824 = vadd.f32 0.0, %v823
        %v825 = vpop.f32.mrb[0].mxu0
        %v826 = vpop.f32.mrb[0].mxu0
        %v827 = vadd.f32 0.0, %v826
        %v828 = vpop.f32.mrb[0].mxu0
        %829 = vmatprep.mubr.bf16.mxu0 0
        %830 = vmatmul.mubr.bf16.gmra.mrb[0].mxu0 %v754
        %v831 = vpop.f32.mrb[0].mxu0
        %v832 = vadd.f32 0.0, %v831
        %v833 = vpop.f32.mrb[0].mxu0
        %v834 = vpop.f32.mrb[0].mxu0
        %v835 = vadd.f32 0.0, %v834
        %v836 = vpop.f32.mrb[0].mxu0
        %837 = vmatprep.mubr.bf16.mxu0 0
        %838 = vmatmul.mubr.bf16.gmra.mrb[0].mxu0 %v757
        %v839 = vpop.f32.mrb[0].mxu0
        %v840 = vadd.f32 0.0, %v839
        %v841 = vpop.f32.mrb[0].mxu0
        %v842 = vpop.f32.mrb[0].mxu0
        %v843 = vadd.f32 0.0, %v842
        %v844 = vpop.f32.mrb[0].mxu0
        %845 = vmatprep.mubr.bf16.mxu0 0
        %846 = vmatmul.mubr.bf16.gmra.mrb[0].mxu0 %v760
        %v847 = vpop.f32.mrb[0].mxu0
        %v848 = vadd.f32 0.0, %v847
        %v849 = vpop.f32.mrb[0].mxu0
        %v850 = vpop.f32.mrb[0].mxu0
        %v851 = vadd.f32 0.0, %v850
        %v852 = vpop.f32.mrb[0].mxu0
        %853 = vmatprep.mubr.bf16.mxu0 0
        %854 = vmatmul.mubr.bf16.gmra.mrb[0].mxu0 %v763
        %v855 = vpop.f32.mrb[0].mxu0
        %v856 = vadd.f32 0.0, %v855
        %v857 = vpop.f32.mrb[0].mxu0
        %v858 = vpop.f32.mrb[0].mxu0
        %v859 = vadd.f32 0.0, %v858
        %v860 = vpop.f32.mrb[0].mxu0
        %861 = vdwg.mxu0
        %s862 = smul.u32 %s37, 8
        %s863 = scalar_lea.vmem [#allocation2], %s862
        %v864 = vld [vmem:[%s863] sm:$0xff]
        %v866 = vcombine.high %v864, %v864
        %v868 = vunpack.c.l.s4 1966171168
        %v869 = vunpack.c.0.s8 %v868
        %v870 = vlaneseq
        %v871 = vshrl.u32 %v870, 7
        %v872 = vsub.s32 %v869, %v871
        %v873 = vrot.slane %v864, %v872
        %v875 = vunpack.c.l.s4 1966171168
        %v876 = vunpack.c.0.s8 %v875
        %v877 = vlaneseq
        %v878 = vshrl.u32 %v877, 7
        %v879 = vsub.s32 %v876, %v878
        %v880 = vrot.slane %v866, %v879
        %v881 = vcombine.high %v873, %v873
        %v882 = vcombine.high %v880, %v880
        %v884 = vunpack.c.l.s4 1966171168
        %v885 = vunpack.c.0.s8 %v884
        %v886 = vlaneseq
        %v887 = vshrl.u32 %v886, 7
        %v888 = vsub.s32 %v885, %v887
        %v889 = vrot.slane %v873, %v888
        %v891 = vunpack.c.l.s4 1966171168
        %v892 = vunpack.c.0.s8 %v891
        %v893 = vlaneseq
        %v894 = vshrl.u32 %v893, 7
        %v895 = vsub.s32 %v892, %v894
        %v896 = vrot.slane %v880, %v895
        %v898 = vunpack.c.l.s4 1966171168
        %v899 = vunpack.c.0.s8 %v898
        %v900 = vlaneseq
        %v901 = vshrl.u32 %v900, 7
        %v902 = vsub.s32 %v899, %v901
        %v903 = vrot.slane %v881, %v902
        %v905 = vunpack.c.l.s4 1966171168
        %v906 = vunpack.c.0.s8 %v905
        %v907 = vlaneseq
        %v908 = vshrl.u32 %v907, 7
        %v909 = vsub.s32 %v906, %v908
        %v910 = vrot.slane %v882, %v909
        %v911 = vcombine.high %v889, %v889
        %v912 = vcombine.high %v896, %v896
        %v913 = vcombine.high %v903, %v903
        %v914 = vcombine.high %v910, %v910
        %v915 = vlaneseq
        %v916 = vshrl.u32 %v915, 7
        %v917 = vsub.s32 0, %v916
        %v918 = vrot.slane %v889, %v917
        %v919 = vlaneseq
        %v920 = vshrl.u32 %v919, 7
        %v921 = vsub.s32 0, %v920
        %v922 = vrot.slane %v903, %v921
        %v923 = vlaneseq
        %v924 = vshrl.u32 %v923, 7
        %v925 = vsub.s32 0, %v924
        %v926 = vrot.slane %v911, %v925
        %v927 = vlaneseq
        %v928 = vshrl.u32 %v927, 7
        %v929 = vsub.s32 0, %v928
        %v930 = vrot.slane %v913, %v929
        %v931 = vlaneseq
        %v932 = vshrl.u32 %v931, 7
        %v933 = vsub.s32 0, %v932
        %v934 = vrot.slane %v896, %v933
        %v935 = vlaneseq
        %v936 = vshrl.u32 %v935, 7
        %v937 = vsub.s32 0, %v936
        %v938 = vrot.slane %v910, %v937
        %v939 = vlaneseq
        %v940 = vshrl.u32 %v939, 7
        %v941 = vsub.s32 0, %v940
        %v942 = vrot.slane %v912, %v941
        %v943 = vlaneseq
        %v944 = vshrl.u32 %v943, 7
        %v945 = vsub.s32 0, %v944
        %v946 = vrot.slane %v914, %v945
        %v955 = vadd.f32 %v800, %v918
        %v956 = vadd.f32 %v803, %v918
        %v957 = vadd.f32 %v808, %v922
        %v958 = vadd.f32 %v811, %v922
        %v959 = vadd.f32 %v816, %v926
        %v960 = vadd.f32 %v819, %v926
        %v961 = vadd.f32 %v824, %v930
        %v962 = vadd.f32 %v827, %v930
        %v963 = vadd.f32 %v832, %v934
        %v964 = vadd.f32 %v835, %v934
        %v965 = vadd.f32 %v840, %v938
        %v966 = vadd.f32 %v843, %v938
        %v967 = vadd.f32 %v848, %v942
        %v968 = vadd.f32 %v851, %v942
        %v969 = vadd.f32 %v856, %v946
        %v970 = vadd.f32 %v859, %v946
        %v971 = vld [vmem:[#allocation3] sm:$0xff]
        %v972 = vld [vmem:[#allocation3 + $0x8] sm:$0xff]
        %v973 = vadd.f32 %v955, %v971
        %v974 = vadd.f32 %v956, %v972
        %v975 = vadd.f32 %v957, %v971
        %v976 = vadd.f32 %v958, %v972
        %v977 = vadd.f32 %v959, %v971
        %v978 = vadd.f32 %v960, %v972
        %v979 = vadd.f32 %v961, %v971
        %v980 = vadd.f32 %v962, %v972
        %v981 = vadd.f32 %v963, %v971
        %v982 = vadd.f32 %v964, %v972
        %v983 = vadd.f32 %v965, %v971
        %v984 = vadd.f32 %v966, %v972
        %v985 = vadd.f32 %v967, %v971
        %v986 = vadd.f32 %v968, %v972
        %v987 = vadd.f32 %v969, %v971
        %v988 = vadd.f32 %v970, %v972
        %v989 = vmax.f32 %v973, 0.0
        %v990 = vmax.f32 %v974, 0.0
        %v991 = vmax.f32 %v975, 0.0
        %v992 = vmax.f32 %v976, 0.0
        %v993 = vmax.f32 %v977, 0.0
        %v994 = vmax.f32 %v978, 0.0
        %v995 = vmax.f32 %v979, 0.0
        %v996 = vmax.f32 %v980, 0.0
        %v997 = vmax.f32 %v981, 0.0
        %v998 = vmax.f32 %v982, 0.0
        %v999 = vmax.f32 %v983, 0.0
        %v1000 = vmax.f32 %v984, 0.0
        %v1001 = vmax.f32 %v985, 0.0
        %v1002 = vmax.f32 %v986, 0.0
        %v1003 = vmax.f32 %v987, 0.0
        %v1004 = vmax.f32 %v988, 0.0
        %v1005 = vld [vmem:[#allocation4] sm:$0xff]
        %v1006 = vld [vmem:[#allocation4 + $0x8] sm:$0xff]
        %v1007 = vsel %vm740, %v989, 0.0
        %v1008 = vsel %vm740, %v991, 0.0
        %v1009 = vadd.f32 %v1007, %v1008
        %v1010 = vsel %vm740, %v993, 0.0
        %v1011 = vadd.f32 %v1009, %v1010
        %v1012 = vsel %vm740, %v995, 0.0
        %v1013 = vadd.f32 %v1011, %v1012
        %v1014 = vsel %vm740, %v997, 0.0
        %v1015 = vadd.f32 %v1013, %v1014
        %v1016 = vsel %vm740, %v999, 0.0
        %v1017 = vadd.f32 %v1015, %v1016
        %v1018 = vsel %vm740, %v1001, 0.0
        %v1019 = vadd.f32 %v1017, %v1018
        %v1020 = vsel %vm740, %v1003, 0.0
        %v1021 = vadd.f32 %v1019, %v1020
        %v1022 = vsel %vm740, %v990, 0.0
        %v1023 = vsel %vm740, %v992, 0.0
        %v1024 = vadd.f32 %v1022, %v1023
        %v1025 = vsel %vm740, %v994, 0.0
        %v1026 = vadd.f32 %v1024, %v1025
        %v1027 = vsel %vm740, %v996, 0.0
        %v1028 = vadd.f32 %v1026, %v1027
        %v1029 = vsel %vm740, %v998, 0.0
        %v1030 = vadd.f32 %v1028, %v1029
        %v1031 = vsel %vm740, %v1000, 0.0
        %v1032 = vadd.f32 %v1030, %v1031
        %v1033 = vsel %vm740, %v1002, 0.0
        %v1034 = vadd.f32 %v1032, %v1033
        %v1035 = vsel %vm740, %v1004, 0.0
        %v1036 = vadd.f32 %v1034, %v1035
        %v1037 = vadd.f32 %v1005, %v1021
        %v1038 = vadd.f32 %v1006, %v1036
        %1039 = vst.msk [vmem:[#allocation4] sm:$0xff] %vm740, %v1037
        %1040 = vst.msk [vmem:[#allocation4 + $0x8] sm:$0xff] %vm740, %v1038
        %p1041 = scmp.eq.s32.totalorder %s37, 1
        // Predicated region
        $region97: #{tpu_custom_call.1} parent=55 // pred_check
          %p1042 = pneg %p1041
        $region98: #{tpu_custom_call.1} parent=55 // pred_check_branch
          %1044 = sbr.rel (%p1042) target = $region100
        $region99: #{tpu_custom_call.1} parent=55 // pred_region
          %v1045 = vld [vmem:[%s428] sm:$0xff]
          %v1046 = vld [vmem:[%s428 + $0x8] sm:$0xff]
          %v1047 = vld [vmem:[#allocation16] sm:$0xff]
          %v1048 = vld [vmem:[#allocation16 + $0x8] sm:$0xff]
          %v1049 = vld [vmem:[#allocation16 + $0x10] sm:$0xff]
          %v1050 = vld [vmem:[#allocation16 + $0x18] sm:$0xff]
          %v1051 = vld [vmem:[#allocation16 + $0x20] sm:$0xff]
          %v1052 = vld [vmem:[#allocation16 + $0x28] sm:$0xff]
          %v1053 = vld [vmem:[#allocation16 + $0x30] sm:$0xff]
          %v1054 = vld [vmem:[#allocation16 + $0x38] sm:$0xff]
          %v1055 = vld [vmem:[#allocation4] sm:$0xff]
          %v1056 = vld [vmem:[#allocation4 + $0x8] sm:$0xff]
          %v1057 = vld [vmem:[#allocation17] sm:$0xff]
          %v1058 = vld [vmem:[#allocation17 + $0x8] sm:$0xff]
          %v1059 = vld [vmem:[#allocation17 + $0x10] sm:$0xff]
          %v1060 = vld [vmem:[#allocation17 + $0x18] sm:$0xff]
          %v1062 = vsel %vm740, %v1055, 0
          %v1065 = vsel %vm740, %v1056, 0
          %1067 = vmatprep.subr.mxu0 0.0
          %1068 = vmatpush1.msra.mxu0 %v1057
          %1069 = vmatprep.subr.mxu0 0.0
          %1070 = vmatpush1.msra.mxu0 %v1058
          %1071 = vmatprep.subr.mxu0 0.0
          %1072 = vmatpush1.msra.mxu0 %v1059
          %1073 = vmatprep.subr.mxu0 0.0
          %1074 = vmatpush1.msra.mxu0 %v1060
          %1075 = vmatprep.subr.mxu0 0.0
          %1076 = vmatpush1.msra.mxu0 0.0
          %1077 = vmatprep.subr.mxu0 0.0
          %1078 = vmatpush1.msra.mxu0 0.0
          %1079 = vmatprep.subr.mxu0 0.0
          %1080 = vmatpush1.msra.mxu0 0.0
          %1081 = vmatprep.subr.mxu0 0.0
          %1082 = vmatpush1.msra.mxu0 0.0
          %1083 = vmatprep.subr.mxu0 0.0
          %1084 = vmatpush1.msra.mxu0 0.0
          %1085 = vmatprep.subr.mxu0 0.0
          %1086 = vmatpush1.msra.mxu0 0.0
          %1087 = vmatprep.subr.mxu0 0.0
          %1088 = vmatpush1.msra.mxu0 0.0
          %1089 = vmatprep.subr.mxu0 0.0
          %1090 = vmatpush1.msra.mxu0 0.0
          %1091 = vmatprep.subr.mxu0 0.0
          %1092 = vmatpush1.msra.mxu0 0.0
          %1093 = vmatprep.subr.mxu0 0.0
          %1094 = vmatpush1.msra.mxu0 0.0
          %1095 = vmatprep.subr.mxu0 0.0
          %1096 = vmatpush1.msra.mxu0 0.0
          %1097 = vmatprep.subr.mxu0 0.0
          %1098 = vmatpush1.msra.mxu0 0.0
          %1099 = vmatprep.subr.mxu0 0.0
          %1100 = vmatpush1.msra.mxu0 0.0
          %1101 = vmatprep.subr.mxu0 0.0
          %1102 = vmatpush1.msra.mxu0 0.0
          %1103 = vmatprep.subr.mxu0 0.0
          %1104 = vmatpush1.msra.mxu0 0.0
          %1105 = vmatprep.subr.mxu0 0.0
          %1106 = vmatpush1.msra.mxu0 0.0
          %1107 = vmatprep.subr.mxu0 0.0
          %1108 = vmatpush1.msra.mxu0 0.0
          %1109 = vmatprep.subr.mxu0 0.0
          %1110 = vmatpush1.msra.mxu0 0.0
          %1111 = vmatprep.subr.mxu0 0.0
          %1112 = vmatpush1.msra.mxu0 0.0
          %1113 = vmatprep.subr.mxu0 0.0
          %1114 = vmatpush1.msra.mxu0 0.0
          %1115 = vmatprep.subr.mxu0 0.0
          %1116 = vmatpush1.msra.mxu0 0.0
          %1117 = vmatprep.subr.mxu0 0.0
          %1118 = vmatpush1.msra.mxu0 0.0
          %1119 = vmatprep.subr.mxu0 0.0
          %1120 = vmatpush1.msra.mxu0 0.0
          %1121 = vmatprep.subr.mxu0 0.0
          %1122 = vmatpush1.msra.mxu0 0.0
          %1123 = vmatprep.subr.mxu0 0.0
          %1124 = vmatpush1.msra.mxu0 0.0
          %1125 = vmatprep.subr.mxu0 0.0
          %1126 = vmatpush1.msra.mxu0 0.0
          %1127 = vmatprep.subr.mxu0 0.0
          %1128 = vmatpush1.msra.mxu0 0.0
          %1129 = vmatprep.subr.mxu0 0.0
          %1130 = vmatpush1.msra.mxu0 0.0
          %1131 = vmatprep.mubr.f32.mxu0 0.0
          %1132 = vmatmul.mubr.f32.gmra.mrb[0].mxu0 %v1062
          %v1133 = vpop.f32.mrb[0].mxu0
          %v1134 = vadd.f32 0.0, %v1133
          %v1135 = vpop.f32.mrb[0].mxu0
          %1136 = vmatprep.mubr.f32.mxu0 0.0
          %1137 = vmatmul.mubr.f32.gmra.mrb[0].mxu0 %v1065
          %v1138 = vpop.f32.mrb[0].mxu0
          %v1139 = vadd.f32 0.0, %v1138
          %v1140 = vpop.f32.mrb[0].mxu0
          %1141 = vdwg.mxu0
          %vm1142 = vcmask 523264
          %v1144 = vsel %vm1142, %v1045, 0
          %v1147 = vsel %vm1142, %v1046, 0
          %1149 = vmatprep.subr.mxu0 0.0
          %1150 = vmatpush1.msra.mxu0 %v1047
          %1151 = vmatprep.subr.mxu0 0.0
          %1152 = vmatpush1.msra.mxu0 %v1048
          %1153 = vmatprep.subr.mxu0 0.0
          %1154 = vmatpush1.msra.mxu0 %v1049
          %1155 = vmatprep.subr.mxu0 0.0
          %1156 = vmatpush1.msra.mxu0 %v1050
          %1157 = vmatprep.subr.mxu0 0.0
          %1158 = vmatpush1.msra.mxu0 %v1051
          %1159 = vmatprep.subr.mxu0 0.0
          %1160 = vmatpush1.msra.mxu0 %v1052
          %1161 = vmatprep.subr.mxu0 0.0
          %1162 = vmatpush1.msra.mxu0 %v1053
          %1163 = vmatprep.subr.mxu0 0.0
          %1164 = vmatpush1.msra.mxu0 %v1054
          %1165 = vmatprep.subr.mxu0 0.0
          %1166 = vmatpush1.msra.mxu0 0.0
          %1167 = vmatprep.subr.mxu0 0.0
          %1168 = vmatpush1.msra.mxu0 0.0
          %1169 = vmatprep.subr.mxu0 0.0
          %1170 = vmatpush1.msra.mxu0 0.0
          %1171 = vmatprep.subr.mxu0 0.0
          %1172 = vmatpush1.msra.mxu0 0.0
          %1173 = vmatprep.subr.mxu0 0.0
          %1174 = vmatpush1.msra.mxu0 0.0
          %1175 = vmatprep.subr.mxu0 0.0
          %1176 = vmatpush1.msra.mxu0 0.0
          %1177 = vmatprep.subr.mxu0 0.0
          %1178 = vmatpush1.msra.mxu0 0.0
          %1179 = vmatprep.subr.mxu0 0.0
          %1180 = vmatpush1.msra.mxu0 0.0
          %1181 = vmatprep.subr.mxu0 0.0
          %1182 = vmatpush1.msra.mxu0 0.0
          %1183 = vmatprep.subr.mxu0 0.0
          %1184 = vmatpush1.msra.mxu0 0.0
          %1185 = vmatprep.subr.mxu0 0.0
          %1186 = vmatpush1.msra.mxu0 0.0
          %1187 = vmatprep.subr.mxu0 0.0
          %1188 = vmatpush1.msra.mxu0 0.0
          %1189 = vmatprep.subr.mxu0 0.0
          %1190 = vmatpush1.msra.mxu0 0.0
          %1191 = vmatprep.subr.mxu0 0.0
          %1192 = vmatpush1.msra.mxu0 0.0
          %1193 = vmatprep.subr.mxu0 0.0
          %1194 = vmatpush1.msra.mxu0 0.0
          %1195 = vmatprep.subr.mxu0 0.0
          %1196 = vmatpush1.msra.mxu0 0.0
          %1197 = vmatprep.subr.mxu0 0.0
          %1198 = vmatpush1.msra.mxu0 0.0
          %1199 = vmatprep.subr.mxu0 0.0
          %1200 = vmatpush1.msra.mxu0 0.0
          %1201 = vmatprep.subr.mxu0 0.0
          %1202 = vmatpush1.msra.mxu0 0.0
          %1203 = vmatprep.subr.mxu0 0.0
          %1204 = vmatpush1.msra.mxu0 0.0
          %1205 = vmatprep.subr.mxu0 0.0
          %1206 = vmatpush1.msra.mxu0 0.0
          %1207 = vmatprep.subr.mxu0 0.0
          %1208 = vmatpush1.msra.mxu0 0.0
          %1209 = vmatprep.subr.mxu0 0.0
          %1210 = vmatpush1.msra.mxu0 0.0
          %1211 = vmatprep.subr.mxu0 0.0
          %1212 = vmatpush1.msra.mxu0 0.0
          %1213 = vmatprep.mubr.f32.mxu0 0.0
          %1214 = vmatmul.mubr.f32.gmra.mrb[0].mxu0 %v1144
          %v1215 = vpop.f32.mrb[0].mxu0
          %v1216 = vadd.f32 %v1134, %v1215
          %v1217 = vpop.f32.mrb[0].mxu0
          %1218 = vmatprep.mubr.f32.mxu0 0.0
          %1219 = vmatmul.mubr.f32.gmra.mrb[0].mxu0 %v1147
          %v1220 = vpop.f32.mrb[0].mxu0
          %v1221 = vadd.f32 %v1139, %v1220
          %v1222 = vpop.f32.mrb[0].mxu0
          %1223 = vdwg.mxu0
          %v1224 = vld [vmem:[#allocation19] sm:$0x1]
          %v1226 = vlaneseq
          %v1227 = vshrl.u32 %v1226, 7
          %v1228 = vsub.s32 0, %v1227
          %v1229 = vrot.slane %v1224, %v1228
          %v1231 = vadd.f32 %v1216, %v1229
          %v1232 = vadd.f32 %v1221, %v1229
          %1233 = vst.msk [vmem:[%s504] sm:$0xff] %vm740, %v1231
          %1234 = vst.msk [vmem:[%s504 + $0x8] sm:$0xff] %vm740, %v1232
        $region100: #{tpu_custom_call.1} parent=55 // pred_fallthru
          _
        %s1235 = sand.u32 %s253, 1
        %s1236 = scalar_lea.sflag [#allocation7], %s1235
        %s1237 = sand.u32 %s253, 1
        %s1238 = smul.addr %s1237, 16
        %s1239 = scalar_lea.vmem [#allocation20], %s1238
        // Predicated region
        $region101: #{tpu_custom_call.1} parent=55 // pred_check
          %p1240 = pneg %p263
        $region102: #{tpu_custom_call.1} parent=55 // pred_check_branch
          %1242 = sbr.rel (%p1240) target = $region104
        $region103: #{tpu_custom_call.1} parent=55 // pred_region
          %s1244 = ssub.s32 256, 256
          %1245 = vsyncadd %s1236, %s1244
          %s1246 = smul.addr %s36, 2
          %s1247 = smul.addr %s1246, 128
          %s1248 = scalar_lea.hbm %s9, %s1247
          %s1249 = sshll.u32 %s1239, 4
          %s1250 = int_to_ptr.vmem [resolvable:$true] %s1249
          %1255 = dma.vmem_to_hbm [thread:$0]  %s1250, 256, %s1248, %s1236, 128, 128, 8
        $region104: #{tpu_custom_call.1} parent=55 // pred_fallthru
          _
      $region56: #{tpu_custom_call.1} parent=5 // pred_fallthru
        _
      %p1256 = scmp.le.s32.totalorder 2, %s27
      // Predicated region
      $region105: #{tpu_custom_call.1} parent=5 // pred_check
        %p1257 = pneg %p1256
      $region106: #{tpu_custom_call.1} parent=5 // pred_check_branch
        %1259 = sbr.rel (%p1257) target = $region108
      $region107: #{tpu_custom_call.1} parent=5 // pred_region
        %s1260 = ssub.s32 %s27, 2
        // Predicated region
        $region109: #{tpu_custom_call.1} parent=107 // pred_check
          %p1261 = pneg %p269
        $region110: #{tpu_custom_call.1} parent=107 // pred_check_branch
          %1263 = sbr.rel (%p1261) target = $region112
        $region111: #{tpu_custom_call.1} parent=107 // pred_region
          %s1264 = sand.u32 %s254, 1
          %s1265 = scalar_lea.sflag [#allocation7], %s1264
          %s1266 = sand.u32 %s254, 1
          %s1267 = smul.addr %s1266, 16
          %s1268 = scalar_lea.vmem [#allocation20], %s1267
          %1269 = dma.done %s1265, 256
        $region112: #{tpu_custom_call.1} parent=107 // pred_fallthru
          _
      $region108: #{tpu_custom_call.1} parent=5 // pred_fallthru
        _
    $region6: #{tpu_custom_call.1} parent=1 // loop_footer
      %s31 = sadd.s32 1, %s27
    $region7: #{tpu_custom_call.1} parent=1 // loop_footer_branch
      %26 = sbr.rel target = $region3
    $region8: #{tpu_custom_call.1} parent=1 // loop_exit
      _
    %1270 = vsyncpa [#allocation6], 1
    %s1271 = scalar_lea.sflag [#allocation6], 1
    %1272 = vsyncpa %s1271, 1
    %1273 = vsyncpa [#allocation9], 1
    %s1274 = scalar_lea.sflag [#allocation9], 1
    %1275 = vsyncpa %s1274, 1
    %1276 = vsyncpa [#allocation12], 1
    %1277 = vsyncpa [#allocation15], 1
    %1278 = vsyncpa [#allocation18], 1
    %1279 = vsyncpa [#allocation7], 1
    %s1280 = scalar_lea.sflag [#allocation7], 1
    %1281 = vsyncpa %s1280, 1

</llo_original>
